<compile_context>
chip_gen: v7x
topology: tpu7x:2x2x1
jax: 0.10.0
libtpu: 0.0.40
codegen_flags: <defaults>
</compile_context>

<pallas_src>
import math

import jax
import jax.numpy as jnp
from jax.experimental import pallas as pl
from jax.experimental.pallas import tpu as pltpu


# --------------------------------------------------------------------------- #
# Kernel
# --------------------------------------------------------------------------- #
def ffn_kernel(x_ref, w1_ref, b1_ref, w2_ref, b2_ref, o_ref, acc_ref):
    # x_ref: (tm, E); w1_ref: (E, th); b1_ref: (1, th); w2_ref: (th, E);
    # b2_ref: (1, E); o_ref: (tm, E); acc_ref: (tm, E) f32 scratch.
    k = pl.program_id(1)

    @pl.when(k == 0)
    def _():
        acc_ref[...] = jnp.zeros_like(acc_ref)

    # First linear chunk + bias + ReLU.  Operands stay in their native dtype
    # (bf16 runs at full MXU rate); accumulation is f32 via preferred_element_type.
    h = jnp.dot(x_ref[...], w1_ref[...], preferred_element_type=jnp.float32)
    h = jnp.maximum(h + b1_ref[...].astype(jnp.float32), 0.0)

    # Second linear chunk, accumulated across hidden-dim chunks.
    acc_ref[...] += jnp.dot(h.astype(w2_ref.dtype), w2_ref[...],
                            preferred_element_type=jnp.float32)

    @pl.when(k == pl.num_programs(1) - 1)
    def _():
        # Dropout in eval mode == identity.
        o_ref[...] = (acc_ref[...] + b2_ref[...].astype(jnp.float32)).astype(o_ref.dtype)


# --------------------------------------------------------------------------- #
# Tile-selection helpers
# --------------------------------------------------------------------------- #
def _round_up(x, m):
    return ((x + m - 1) // m) * m


def _vmem_capacity_bytes():
    """Physical VMEM per TensorCore; conservative 64 MiB (v7x) fallback."""
    try:
        info = pltpu.get_tpu_info()
        cap = getattr(info, "vmem_capacity_bytes", None)
        if cap:
            return int(cap)
    except Exception:
        pass
    return 64 << 20


def _largest_hidden_tile(H, cap):
    """Largest multiple of 128 that divides H and is <= cap (H % 128 == 0)."""
    cap = max(128, min(cap, H))
    t = (cap // 128) * 128
    while t > 128 and H % t != 0:
        t -= 128
    return t


def _vmem_bytes(tm, th, E, act_bytes, w_bytes):
    """Estimate per-step VMEM: double-buffered pipeline blocks + scratch + temps."""
    dbl = 2  # default pipeline double-buffering
    x_blk = tm * E * act_bytes * dbl
    w1_blk = E * th * w_bytes * dbl
    b1_blk = 8 * th * w_bytes * dbl          # sublane-padded
    w2_blk = th * E * w_bytes * dbl
    b2_blk = 8 * E * w_bytes * dbl
    out_blk = tm * E * act_bytes * dbl
    acc = tm * E * 4                          # f32 accumulator scratch
    h_tmp = tm * th * 4                       # f32 intermediate (compiler temp)
    return x_blk + w1_blk + b1_blk + w2_blk + b2_blk + out_blk + acc + h_tmp


# --------------------------------------------------------------------------- #
# Wrapper
# --------------------------------------------------------------------------- #
def feed_forward(x, w1, b1, w2, b2, *, tm=512, th=512, vmem_budget_bytes=None):
    """x: (..., E) -> (..., E). Fused FFN (Linear->ReLU->Linear) via one pallas_call."""
    orig_shape = x.shape
    E = orig_shape[-1]
    H = w1.shape[1]
    assert E % 128 == 0, "embedding dim must be lane-dense (multiple of 128)"
    assert H % 128 == 0, "hidden dim must be lane-dense (multiple of 128)"
    assert w1.shape == (E, H) and w2.shape == (H, E)

    x2d = x.reshape(-1, E)
    M = x2d.shape[0]

    act_bytes = x.dtype.itemsize
    w_bytes = w1.dtype.itemsize
    # Sublane packing multiple for the activation dtype (8 f32 / 16 bf16 / 32 int8,fp8).
    sublane = {4: 8, 2: 16, 1: 32}.get(act_bytes, 8)

    # ---- row tile -----------------------------------------------------------
    tm = max(sublane, min(tm, _round_up(M, sublane)))
    tm = _round_up(tm, sublane)
    # Megacore / v7x: keep >= 2 row tiles when there is enough work so the
    # "parallel" token axis actually shards across both TensorCores.
    if M > 256 and pl.cdiv(M, tm) < 2:
        tm = _round_up(pl.cdiv(M, 2), 256)

    # ---- VMEM budget --------------------------------------------------------
    if vmem_budget_bytes is None:
        cap = _vmem_capacity_bytes()
        vmem_budget_bytes = max(24 << 20, min(int(cap * 0.75), cap - (16 << 20)))

    def fits(tm_, th_):
        return _vmem_bytes(tm_, th_, E, act_bytes, w_bytes) <= vmem_budget_bytes

    # ---- hidden tile --------------------------------------------------------
    if fits(tm, H):
        # Whole hidden dim resident: weights DMA'd once for the entire grid
        # (also removes per-step overhead for tiny workloads).
        th = H
    else:
        th = _largest_hidden_tile(H, min(th, H))
        # Shrink th first (weight-streaming intensity depends on tm, not th),
        # then tm, until the double-buffered working set fits the budget.
        while not fits(tm, th):
            if th > 256:
                th = _largest_hidden_tile(H, th - 128)
            elif tm > 256:
                tm = max(256, tm - 256)
            elif th > 128:
                th = _largest_hidden_tile(H, th - 128)
            elif tm > sublane:
                tm = max(sublane, _round_up(tm // 2, sublane))
            else:
                break

    grid = (pl.cdiv(M, tm), H // th)
    rows = grid[0]
    # Weights are re-fetched whenever their block index changes: once per row
    # tile when k is tiled, exactly once when th == H (constant index map).
    weight_passes = 1 if grid[1] == 1 else rows

    b1_2d = b1.reshape(1, H)
    b2_2d = b2.reshape(1, E)

    cost = pl.CostEstimate(
        flops=4 * M * E * H,  # two matmuls: 2*M*E*H each
        transcendentals=0,
        bytes_accessed=(M * E * act_bytes                       # x read
                        + M * E * act_bytes                     # out write
                        + weight_passes * (E * H + H * E) * w_bytes
                        + weight_passes * H * b1.dtype.itemsize
                        + E * b2.dtype.itemsize),
    )

    out = pl.pallas_call(
        ffn_kernel,
        out_shape=jax.ShapeDtypeStruct((M, E), x.dtype),
        grid_spec=pltpu.PrefetchScalarGridSpec(
            num_scalar_prefetch=0,
            grid=grid,
            in_specs=[
                pl.BlockSpec((tm, E), lambda i, k: (i, 0)),   # x row tile (reused over k)
                pl.BlockSpec((E, th), lambda i, k: (0, k)),   # W1 hidden chunk
                pl.BlockSpec((1, th), lambda i, k: (0, k)),   # b1 hidden chunk
                pl.BlockSpec((th, E), lambda i, k: (k, 0)),   # W2 hidden chunk
                pl.BlockSpec((1, E), lambda i, k: (0, 0)),    # b2 (constant)
            ],
            out_specs=pl.BlockSpec((tm, E), lambda i, k: (i, 0)),
            scratch_shapes=[pltpu.VMEM((tm, E), jnp.float32)],
        ),
        compiler_params=pltpu.CompilerParams(
            dimension_semantics=("parallel", "arbitrary"),
            vmem_limit_bytes=int(vmem_budget_bytes),
        ),
        cost_estimate=cost,
    )(x2d, w1, b1_2d, w2, b2_2d)

    return out.reshape(orig_shape)


# --------------------------------------------------------------------------- #
# Params / demo
# --------------------------------------------------------------------------- #
def init_params(key, n_embedding, dtype=jnp.float32):
    """Mirror PyTorch nn.Linear default init: U(-1/sqrt(in), 1/sqrt(in))."""
    hidden = 4 * n_embedding
    k1, k2, k3, k4 = jax.random.split(key, 4)
    bound1 = 1.0 / math.sqrt(n_embedding)
    bound2 = 1.0 / math.sqrt(hidden)
    # Stored as (in_features, out_features).
    w1 = jax.random.uniform(k1, (n_embedding, hidden), dtype, -bound1, bound1)
    b1 = jax.random.uniform(k2, (hidden,), dtype, -bound1, bound1)
    w2 = jax.random.uniform(k3, (hidden, n_embedding), dtype, -bound2, bound2)
    b2 = jax.random.uniform(k4, (n_embedding,), dtype, -bound2, bound2)
    return w1, b1, w2, b2


if __name__ == "__main__":
    # Small shapes consistent with the module's forward: x is (batch, seq, n_embedding).
    # E kept a multiple of 128 so the output slab is lane-dense.
    batch, seq, n_embedding = 2, 8, 256

    key = jax.random.PRNGKey(0)
    kx, kp = jax.random.split(key)
    x = jax.random.normal(kx, (batch, seq, n_embedding), jnp.float32)
    w1, b1, w2, b2 = init_params(kp, n_embedding)

    out = feed_forward(x, w1, b1, w2, b2)
    out = jax.block_until_ready(out)

    # Sanity check against a pure-JAX reference of the same math (eval-mode dropout).
    ref = jnp.maximum(x @ w1 + b1, 0.0) @ w2 + b2
    assert out.shape == x.shape
    assert jnp.allclose(out, ref, atol=1e-4, rtol=1e-4)

    print("KERNEL_OK")
</pallas_src>

<mosaic_0001>
module attributes {stable_mosaic.version = 11 : i64} {
  func.func @ffn_kernel(%arg0: i32, %arg1: i32, %arg2: memref<16x256xf32, #tpu.memory_space<vmem>>, %arg3: memref<256x1024xf32, #tpu.memory_space<vmem>>, %arg4: memref<1x1024xf32, #tpu.memory_space<vmem>>, %arg5: memref<1024x256xf32, #tpu.memory_space<vmem>>, %arg6: memref<1x256xf32, #tpu.memory_space<vmem>>, %arg7: memref<16x256xf32, #tpu.memory_space<vmem>>, %arg8: memref<16x256xf32, #tpu.memory_space<vmem>>) attributes {dimension_semantics = [#tpu.dimension_semantics<parallel>, #tpu.dimension_semantics<arbitrary>], iteration_bounds = array<i64: 1, 1>, scalar_prefetch = 0 : i64, scratch_operands = 1 : i64, tpu.core_type = #tpu.core_type<tc>, window_params = [{transform_indices = @transform_0, window_bounds = array<i64: 16, 256>}, {transform_indices = @transform_1, window_bounds = array<i64: 256, 1024>}, {transform_indices = @transform_2, window_bounds = array<i64: 1, 1024>}, {transform_indices = @transform_3, window_bounds = array<i64: 1024, 256>}, {pipeline_mode = #tpu.pipeline_mode<synchronous>, transform_indices = @transform_4, window_bounds = array<i64: 1, 256>}, {transform_indices = @transform_5, window_bounds = array<i64: 16, 256>}]} {
    %c0_i32 = arith.constant 0 : i32
    %0 = arith.cmpi eq, %arg1, %c0_i32 : i32
    %1 = arith.extui %0 : i1 to i32
    %c0_i32_0 = arith.constant 0 : i32
    %2 = arith.cmpi ne, %1, %c0_i32_0 : i32
    scf.if %2 {
      %cst_16 = arith.constant 0.000000e+00 : f32
      %19 = vector.broadcast %cst_16 : f32 to vector<16x256xf32>
      %c0_17 = arith.constant 0 : index
      %c0_18 = arith.constant 0 : index
      %20 = vector.load %arg8[%c0_17, %c0_18] : memref<16x256xf32, #tpu.memory_space<vmem>>, vector<16x256xf32>
      tpu.vector_store %arg8[%c0_17, %c0_18], %19 {strides = array<i32>} : memref<16x256xf32, #tpu.memory_space<vmem>>, vector<16x256xf32>,
    } else {
    }
    %c0 = arith.constant 0 : index
    %c0_1 = arith.constant 0 : index
    %3 = vector.load %arg2[%c0, %c0_1] : memref<16x256xf32, #tpu.memory_space<vmem>>, vector<16x256xf32>
    %c0_2 = arith.constant 0 : index
    %c0_3 = arith.constant 0 : index
    %4 = vector.load %arg3[%c0_2, %c0_3] : memref<256x1024xf32, #tpu.memory_space<vmem>>, vector<256x1024xf32>
    %cst = arith.constant dense<0.000000e+00> : vector<16x1024xf32>
    %5 = tpu.matmul %3, %4, %cst {dimension_numbers = #tpu.dot_dimension_numbers<[1], [0], [0], [1], [0, 0, 1, 1], [], []>} : vector<16x256xf32>, vector<256x1024xf32>, vector<16x1024xf32> -> vector<16x1024xf32>
    %c0_4 = arith.constant 0 : index
    %c0_5 = arith.constant 0 : index
    %6 = vector.load %arg4[%c0_4, %c0_5] : memref<1x1024xf32, #tpu.memory_space<vmem>>, vector<1x1024xf32>
    %7 = vector.broadcast %6 : vector<1x1024xf32> to vector<16x1024xf32>
    %8 = arith.addf %5, %7 : vector<16x1024xf32>
    %cst_6 = arith.constant 0.000000e+00 : f32
    %9 = vector.broadcast %cst_6 : f32 to vector<16x1024xf32>
    %10 = arith.maximumf %8, %9 : vector<16x1024xf32>
    %c0_7 = arith.constant 0 : index
    %c0_8 = arith.constant 0 : index
    %11 = vector.load %arg8[%c0_7, %c0_8] : memref<16x256xf32, #tpu.memory_space<vmem>>, vector<16x256xf32>
    %c0_9 = arith.constant 0 : index
    %c0_10 = arith.constant 0 : index
    %12 = vector.load %arg5[%c0_9, %c0_10] : memref<1024x256xf32, #tpu.memory_space<vmem>>, vector<1024x256xf32>
    %cst_11 = arith.constant dense<0.000000e+00> : vector<16x256xf32>
    %13 = tpu.matmul %10, %12, %cst_11 {dimension_numbers = #tpu.dot_dimension_numbers<[1], [0], [0], [1], [0, 0, 1, 1], [], []>} : vector<16x1024xf32>, vector<1024x256xf32>, vector<16x256xf32> -> vector<16x256xf32>
    %14 = arith.addf %11, %13 : vector<16x256xf32>
    %c0_12 = arith.constant 0 : index
    %c0_13 = arith.constant 0 : index
    %15 = vector.load %arg8[%c0_12, %c0_13] : memref<16x256xf32, #tpu.memory_space<vmem>>, vector<16x256xf32>
    tpu.vector_store %arg8[%c0_12, %c0_13], %14 {strides = array<i32>} : memref<16x256xf32, #tpu.memory_space<vmem>>, vector<16x256xf32>,
    %c0_i32_14 = arith.constant 0 : i32
    %16 = arith.cmpi eq, %arg1, %c0_i32_14 : i32
    %17 = arith.extui %16 : i1 to i32
    %c0_i32_15 = arith.constant 0 : i32
    %18 = arith.cmpi ne, %17, %c0_i32_15 : i32
    scf.if %18 {
      %c0_16 = arith.constant 0 : index
      %c0_17 = arith.constant 0 : index
      %19 = vector.load %arg8[%c0_16, %c0_17] : memref<16x256xf32, #tpu.memory_space<vmem>>, vector<16x256xf32>
      %c0_18 = arith.constant 0 : index
      %c0_19 = arith.constant 0 : index
      %20 = vector.load %arg6[%c0_18, %c0_19] : memref<1x256xf32, #tpu.memory_space<vmem>>, vector<1x256xf32>
      %21 = vector.broadcast %20 : vector<1x256xf32> to vector<16x256xf32>
      %22 = arith.addf %19, %21 : vector<16x256xf32>
      %c0_20 = arith.constant 0 : index
      %c0_21 = arith.constant 0 : index
      %23 = vector.load %arg7[%c0_20, %c0_21] : memref<16x256xf32, #tpu.memory_space<vmem>>, vector<16x256xf32>
      tpu.vector_store %arg7[%c0_20, %c0_21], %22 {strides = array<i32>} : memref<16x256xf32, #tpu.memory_space<vmem>>, vector<16x256xf32>,
    } else {
    }
    return
  }
  func.func @transform_0(%arg0: i32, %arg1: i32) -> (i32, i32) {
    %c0_i32 = arith.constant 0 : i32
    %c0_i32_0 = arith.constant 0 : i32
    return %arg0, %c0_i32 : i32, i32
  }
  func.func @transform_1(%arg0: i32, %arg1: i32) -> (i32, i32) {
    %c0_i32 = arith.constant 0 : i32
    %c0_i32_0 = arith.constant 0 : i32
    return %c0_i32, %arg1 : i32, i32
  }
  func.func @transform_2(%arg0: i32, %arg1: i32) -> (i32, i32) {
    %c0_i32 = arith.constant 0 : i32
    %c0_i32_0 = arith.constant 0 : i32
    return %c0_i32, %arg1 : i32, i32
  }
  func.func @transform_3(%arg0: i32, %arg1: i32) -> (i32, i32) {
    %c0_i32 = arith.constant 0 : i32
    %c0_i32_0 = arith.constant 0 : i32
    return %arg1, %c0_i32 : i32, i32
  }
  func.func @transform_4(%arg0: i32, %arg1: i32) -> (i32, i32) {
    %c0_i32 = arith.constant 0 : i32
    %c0_i32_0 = arith.constant 0 : i32
    %c0_i32_1 = arith.constant 0 : i32
    return %c0_i32, %c0_i32_0 : i32, i32
  }
  func.func @transform_5(%arg0: i32, %arg1: i32) -> (i32, i32) {
    %c0_i32 = arith.constant 0 : i32
    %c0_i32_0 = arith.constant 0 : i32
    return %arg0, %c0_i32 : i32, i32
  }
}

</mosaic_0001>

<llo_original>
// kernel: tpu_custom_call.1
$region0: #{tpu_custom_call.1}
  #allocation0 [shape = 'u32[]', space=smem, size = 0x4, offset = 0x4, fixed_abs, tag = 'smem constant byte address 0x4 - core index']
  #allocation1 [shape = 'u32[144,128]{1,0:T(1,128)}', space=vmem, size = 0x12000, scoped, tag = 'internal scratch']
  #allocation2 [shape = 'f32[16,256]{1,0:T(8,128)}', space=vmem, size = 0x4000, scoped, tag = 'scratch operand']
  %s0 = inlined_call_operand.hbm [shape: f32[16,256], index: 0, kind: input, shape index: {}]
  %s1 = inlined_call_operand.hbm [shape: f32[256,1024], index: 1, kind: input, shape index: {}]
  %s2 = inlined_call_operand.hbm [shape: f32[1,1024], index: 2, kind: input, shape index: {}]
  %s3 = inlined_call_operand.hbm [shape: f32[1024,256], index: 3, kind: input, shape index: {}]
  %s4 = inlined_call_operand.vmem [shape: f32[1,256], index: 4, kind: input, shape index: {}]
  %s5 = inlined_call_operand.hbm [shape: f32[16,256], index: 5, kind: output, shape index: {}]
  %s6 = sld [smem:[#allocation0]]
  $region54: #{tpu_custom_call.1} parent=0
    _
  %s8 = ssub.s32 1, %s6
  %s9 = scalar_select 0, %s8, %s6
  $region1: #{tpu_custom_call.1} parent=0
    #allocation3 [shape = 'u8[16384]{0}', space=vmem, size = 0x4000, scoped, tag = 'input window, operand 0, single buffered']
    #allocation4 [shape = 's32[1]{0}', space=sflag, size = 0x4, scoped, tag = 'scoped memory for tpu_custom_call.1']
    #allocation5 [shape = 's32[1]{0}', space=sflag, size = 0x4, scoped, tag = 'scoped memory for tpu_custom_call.1']
    #allocation6 [shape = 'u8[1048576]{0}', space=vmem, size = 0x100000, scoped, tag = 'input window, operand 1, single buffered']
    #allocation7 [shape = 's32[1]{0}', space=sflag, size = 0x4, scoped, tag = 'scoped memory for tpu_custom_call.1']
    #allocation8 [shape = 'u8[4096]{0}', space=vmem, size = 0x1000, scoped, tag = 'input window, operand 2, single buffered']
    #allocation9 [shape = 'u8[1048576]{0}', space=vmem, size = 0x100000, scoped, tag = 'input window, operand 3, single buffered']
    #allocation10 [shape = 's32[1]{0}', space=sflag, size = 0x4, scoped, tag = 'scoped memory for tpu_custom_call.1']
    #allocation11 [shape = 'u8[16384]{0}', space=vmem, size = 0x4000, scoped, tag = 'output window, operand 0, single buffered']
    %10 = vsyncpa [#allocation4], 0
    %11 = vsyncpa [#allocation7], 0
    %12 = vsyncpa [#allocation10], 0
    %13 = vsyncpa [#allocation5], 0
    // Predicated region
    $region2: #{tpu_custom_call.1} parent=1 // pred_check
      _
    $region3: #{tpu_custom_call.1} parent=1 // pred_check_branch
      %15 = sbr.rel (0) target = $region5
    $region4: #{tpu_custom_call.1} parent=1 // pred_region
      %s17 = ssub.s32 512, 512
      %18 = vsyncadd [#allocation4], %s17
      %s19 = sshll.u32 [#allocation3], 4
      %s20 = int_to_ptr.vmem [resolvable:$true] %s19
      %25 = dma.hbm_to_vmem [thread:$0]  %s0, 512, %s20, [#allocation4], 256, 256, 16
    $region5: #{tpu_custom_call.1} parent=1 // pred_fallthru
      _
    // Predicated region
    $region6: #{tpu_custom_call.1} parent=1 // pred_check
      _
    $region7: #{tpu_custom_call.1} parent=1 // pred_check_branch
      %27 = sbr.rel (0) target = $region9
    $region8: #{tpu_custom_call.1} parent=1 // pred_region
      %s29 = ssub.s32 32768, 32768
      %30 = vsyncadd [#allocation7], %s29
      %s31 = sshll.u32 [#allocation6], 4
      %s32 = int_to_ptr.vmem [resolvable:$true] %s31
      %37 = dma.hbm_to_vmem [thread:$0]  %s1, 32768, %s32, [#allocation7], 1024, 1024, 64
    $region9: #{tpu_custom_call.1} parent=1 // pred_fallthru
      _
    // Predicated region
    $region10: #{tpu_custom_call.1} parent=1 // pred_check
      _
    $region11: #{tpu_custom_call.1} parent=1 // pred_check_branch
      %39 = sbr.rel (0) target = $region13
    $region12: #{tpu_custom_call.1} parent=1 // pred_region
      %s41 = ssub.s32 128, 128
      %42 = vsyncadd [#allocation7], %s41
      %s44 = sshll.u32 [#allocation8], 4
      %s45 = int_to_ptr.vmem [resolvable:$true] %s44
      %47 = dma.hbm_to_vmem [thread:$0]  %s2, 128, %s45, [#allocation7]
    $region13: #{tpu_custom_call.1} parent=1 // pred_fallthru
      _
    // Predicated region
    $region14: #{tpu_custom_call.1} parent=1 // pred_check
      _
    $region15: #{tpu_custom_call.1} parent=1 // pred_check_branch
      %49 = sbr.rel (0) target = $region17
    $region16: #{tpu_custom_call.1} parent=1 // pred_region
      %s51 = ssub.s32 32768, 32768
      %52 = vsyncadd [#allocation10], %s51
      %s53 = sshll.u32 [#allocation9], 4
      %s54 = int_to_ptr.vmem [resolvable:$true] %s53
      %59 = dma.hbm_to_vmem [thread:$0]  %s3, 32768, %s54, [#allocation10], 256, 256, 16
    $region17: #{tpu_custom_call.1} parent=1 // pred_fallthru
      _
    // Predicated region
    $region18: #{tpu_custom_call.1} parent=1 // pred_check
      _
    $region19: #{tpu_custom_call.1} parent=1 // pred_check_branch
      %61 = sbr.rel (0) target = $region21
    $region20: #{tpu_custom_call.1} parent=1 // pred_region
      _
    $region21: #{tpu_custom_call.1} parent=1 // pred_fallthru
      _
    // Predicated region
    $region22: #{tpu_custom_call.1} parent=1 // pred_check
      _
    $region23: #{tpu_custom_call.1} parent=1 // pred_check_branch
      %63 = sbr.rel (0) target = $region25
    $region24: #{tpu_custom_call.1} parent=1 // pred_region
      %64 = dma.done [#allocation4], 512
    $region25: #{tpu_custom_call.1} parent=1 // pred_fallthru
      _
    // Predicated region
    $region26: #{tpu_custom_call.1} parent=1 // pred_check
      _
    $region27: #{tpu_custom_call.1} parent=1 // pred_check_branch
      %66 = sbr.rel (0) target = $region29
    $region28: #{tpu_custom_call.1} parent=1 // pred_region
      %67 = dma.done [#allocation7], 32768
    $region29: #{tpu_custom_call.1} parent=1 // pred_fallthru
      _
    // Predicated region
    $region30: #{tpu_custom_call.1} parent=1 // pred_check
      _
    $region31: #{tpu_custom_call.1} parent=1 // pred_check_branch
      %69 = sbr.rel (0) target = $region33
    $region32: #{tpu_custom_call.1} parent=1 // pred_region
      %70 = dma.done [#allocation7], 128
    $region33: #{tpu_custom_call.1} parent=1 // pred_fallthru
      _
    // Predicated region
    $region34: #{tpu_custom_call.1} parent=1 // pred_check
      _
    $region35: #{tpu_custom_call.1} parent=1 // pred_check_branch
      %72 = sbr.rel (0) target = $region37
    $region36: #{tpu_custom_call.1} parent=1 // pred_region
      %73 = dma.done [#allocation10], 32768
    $region37: #{tpu_custom_call.1} parent=1 // pred_fallthru
      _
    %p74 = scmp.eq.s32.totalorder 0, 0
    // Predicated region
    $region38: #{tpu_custom_call.1} parent=1 // pred_check
      %p75 = pneg %p74
    $region39: #{tpu_custom_call.1} parent=1 // pred_check_branch
      %77 = sbr.rel (%p75) target = $region41
    $region40: #{tpu_custom_call.1} parent=1 // pred_region
      %78 = vst [vmem:[#allocation2] sm:$0xff] 0.0
      %79 = vst [vmem:[#allocation2 + $0x8] sm:$0xff] 0.0
      %80 = vst [vmem:[#allocation2 + $0x10] sm:$0xff] 0.0
      %81 = vst [vmem:[#allocation2 + $0x18] sm:$0xff] 0.0
    $region41: #{tpu_custom_call.1} parent=1 // pred_fallthru
      _
    %v82 = vld [vmem:[#allocation3] sm:$0xff]
    %v83 = vld [vmem:[#allocation3 + $0x8] sm:$0xff]
    %v84 = vld [vmem:[#allocation3 + $0x10] sm:$0xff]
    %v85 = vld [vmem:[#allocation3 + $0x18] sm:$0xff]
    %v86 = vld [vmem:[#allocation6] sm:$0xff]
    %v87 = vld [vmem:[#allocation6 + $0x8] sm:$0xff]
    %v88 = vld [vmem:[#allocation6 + $0x10] sm:$0xff]
    %v89 = vld [vmem:[#allocation6 + $0x18] sm:$0xff]
    %v90 = vld [vmem:[#allocation6 + $0x20] sm:$0xff]
    %v91 = vld [vmem:[#allocation6 + $0x28] sm:$0xff]
    %v92 = vld [vmem:[#allocation6 + $0x30] sm:$0xff]
    %v93 = vld [vmem:[#allocation6 + $0x38] sm:$0xff]
    %v94 = vld [vmem:[#allocation6 + $0x40] sm:$0xff]
    %v95 = vld [vmem:[#allocation6 + $0x48] sm:$0xff]
    %v96 = vld [vmem:[#allocation6 + $0x50] sm:$0xff]
    %v97 = vld [vmem:[#allocation6 + $0x58] sm:$0xff]
    %v98 = vld [vmem:[#allocation6 + $0x60] sm:$0xff]
    %v99 = vld [vmem:[#allocation6 + $0x68] sm:$0xff]
    %v100 = vld [vmem:[#allocation6 + $0x70] sm:$0xff]
    %v101 = vld [vmem:[#allocation6 + $0x78] sm:$0xff]
    %v102 = vld [vmem:[#allocation6 + $0x80] sm:$0xff]
    %v103 = vld [vmem:[#allocation6 + $0x88] sm:$0xff]
    %v104 = vld [vmem:[#allocation6 + $0x90] sm:$0xff]
    %v105 = vld [vmem:[#allocation6 + $0x98] sm:$0xff]
    %v106 = vld [vmem:[#allocation6 + $0xa0] sm:$0xff]
    %v107 = vld [vmem:[#allocation6 + $0xa8] sm:$0xff]
    %v108 = vld [vmem:[#allocation6 + $0xb0] sm:$0xff]
    %v109 = vld [vmem:[#allocation6 + $0xb8] sm:$0xff]
    %v110 = vld [vmem:[#allocation6 + $0xc0] sm:$0xff]
    %v111 = vld [vmem:[#allocation6 + $0xc8] sm:$0xff]
    %v112 = vld [vmem:[#allocation6 + $0xd0] sm:$0xff]
    %v113 = vld [vmem:[#allocation6 + $0xd8] sm:$0xff]
    %v114 = vld [vmem:[#allocation6 + $0xe0] sm:$0xff]
    %v115 = vld [vmem:[#allocation6 + $0xe8] sm:$0xff]
    %v116 = vld [vmem:[#allocation6 + $0xf0] sm:$0xff]
    %v117 = vld [vmem:[#allocation6 + $0xf8] sm:$0xff]
    %v118 = vld [vmem:[#allocation6 + $0x100] sm:$0xff]
    %v119 = vld [vmem:[#allocation6 + $0x108] sm:$0xff]
    %v120 = vld [vmem:[#allocation6 + $0x110] sm:$0xff]
    %v121 = vld [vmem:[#allocation6 + $0x118] sm:$0xff]
    %v122 = vld [vmem:[#allocation6 + $0x120] sm:$0xff]
    %v123 = vld [vmem:[#allocation6 + $0x128] sm:$0xff]
    %v124 = vld [vmem:[#allocation6 + $0x130] sm:$0xff]
    %v125 = vld [vmem:[#allocation6 + $0x138] sm:$0xff]
    %v126 = vld [vmem:[#allocation6 + $0x140] sm:$0xff]
    %v127 = vld [vmem:[#allocation6 + $0x148] sm:$0xff]
    %v128 = vld [vmem:[#allocation6 + $0x150] sm:$0xff]
    %v129 = vld [vmem:[#allocation6 + $0x158] sm:$0xff]
    %v130 = vld [vmem:[#allocation6 + $0x160] sm:$0xff]
    %v131 = vld [vmem:[#allocation6 + $0x168] sm:$0xff]
    %v132 = vld [vmem:[#allocation6 + $0x170] sm:$0xff]
    %v133 = vld [vmem:[#allocation6 + $0x178] sm:$0xff]
    %v134 = vld [vmem:[#allocation6 + $0x180] sm:$0xff]
    %v135 = vld [vmem:[#allocation6 + $0x188] sm:$0xff]
    %v136 = vld [vmem:[#allocation6 + $0x190] sm:$0xff]
    %v137 = vld [vmem:[#allocation6 + $0x198] sm:$0xff]
    %v138 = vld [vmem:[#allocation6 + $0x1a0] sm:$0xff]
    %v139 = vld [vmem:[#allocation6 + $0x1a8] sm:$0xff]
    %v140 = vld [vmem:[#allocation6 + $0x1b0] sm:$0xff]
    %v141 = vld [vmem:[#allocation6 + $0x1b8] sm:$0xff]
    %v142 = vld [vmem:[#allocation6 + $0x1c0] sm:$0xff]
    %v143 = vld [vmem:[#allocation6 + $0x1c8] sm:$0xff]
    %v144 = vld [vmem:[#allocation6 + $0x1d0] sm:$0xff]
    %v145 = vld [vmem:[#allocation6 + $0x1d8] sm:$0xff]
    %v146 = vld [vmem:[#allocation6 + $0x1e0] sm:$0xff]
    %v147 = vld [vmem:[#allocation6 + $0x1e8] sm:$0xff]
    %v148 = vld [vmem:[#allocation6 + $0x1f0] sm:$0xff]
    %v149 = vld [vmem:[#allocation6 + $0x1f8] sm:$0xff]
    %v150 = vld [vmem:[#allocation6 + $0x200] sm:$0xff]
    %v151 = vld [vmem:[#allocation6 + $0x208] sm:$0xff]
    %v152 = vld [vmem:[#allocation6 + $0x210] sm:$0xff]
    %v153 = vld [vmem:[#allocation6 + $0x218] sm:$0xff]
    %v154 = vld [vmem:[#allocation6 + $0x220] sm:$0xff]
    %v155 = vld [vmem:[#allocation6 + $0x228] sm:$0xff]
    %v156 = vld [vmem:[#allocation6 + $0x230] sm:$0xff]
    %v157 = vld [vmem:[#allocation6 + $0x238] sm:$0xff]
    %v158 = vld [vmem:[#allocation6 + $0x240] sm:$0xff]
    %v159 = vld [vmem:[#allocation6 + $0x248] sm:$0xff]
    %v160 = vld [vmem:[#allocation6 + $0x250] sm:$0xff]
    %v161 = vld [vmem:[#allocation6 + $0x258] sm:$0xff]
    %v162 = vld [vmem:[#allocation6 + $0x260] sm:$0xff]
    %v163 = vld [vmem:[#allocation6 + $0x268] sm:$0xff]
    %v164 = vld [vmem:[#allocation6 + $0x270] sm:$0xff]
    %v165 = vld [vmem:[#allocation6 + $0x278] sm:$0xff]
    %v166 = vld [vmem:[#allocation6 + $0x280] sm:$0xff]
    %v167 = vld [vmem:[#allocation6 + $0x288] sm:$0xff]
    %v168 = vld [vmem:[#allocation6 + $0x290] sm:$0xff]
    %v169 = vld [vmem:[#allocation6 + $0x298] sm:$0xff]
    %v170 = vld [vmem:[#allocation6 + $0x2a0] sm:$0xff]
    %v171 = vld [vmem:[#allocation6 + $0x2a8] sm:$0xff]
    %v172 = vld [vmem:[#allocation6 + $0x2b0] sm:$0xff]
    %v173 = vld [vmem:[#allocation6 + $0x2b8] sm:$0xff]
    %v174 = vld [vmem:[#allocation6 + $0x2c0] sm:$0xff]
    %v175 = vld [vmem:[#allocation6 + $0x2c8] sm:$0xff]
    %v176 = vld [vmem:[#allocation6 + $0x2d0] sm:$0xff]
    %v177 = vld [vmem:[#allocation6 + $0x2d8] sm:$0xff]
    %v178 = vld [vmem:[#allocation6 + $0x2e0] sm:$0xff]
    %v179 = vld [vmem:[#allocation6 + $0x2e8] sm:$0xff]
    %v180 = vld [vmem:[#allocation6 + $0x2f0] sm:$0xff]
    %v181 = vld [vmem:[#allocation6 + $0x2f8] sm:$0xff]
    %v182 = vld [vmem:[#allocation6 + $0x300] sm:$0xff]
    %v183 = vld [vmem:[#allocation6 + $0x308] sm:$0xff]
    %v184 = vld [vmem:[#allocation6 + $0x310] sm:$0xff]
    %v185 = vld [vmem:[#allocation6 + $0x318] sm:$0xff]
    %v186 = vld [vmem:[#allocation6 + $0x320] sm:$0xff]
    %v187 = vld [vmem:[#allocation6 + $0x328] sm:$0xff]
    %v188 = vld [vmem:[#allocation6 + $0x330] sm:$0xff]
    %v189 = vld [vmem:[#allocation6 + $0x338] sm:$0xff]
    %v190 = vld [vmem:[#allocation6 + $0x340] sm:$0xff]
    %v191 = vld [vmem:[#allocation6 + $0x348] sm:$0xff]
    %v192 = vld [vmem:[#allocation6 + $0x350] sm:$0xff]
    %v193 = vld [vmem:[#allocation6 + $0x358] sm:$0xff]
    %v194 = vld [vmem:[#allocation6 + $0x360] sm:$0xff]
    %v195 = vld [vmem:[#allocation6 + $0x368] sm:$0xff]
    %v196 = vld [vmem:[#allocation6 + $0x370] sm:$0xff]
    %v197 = vld [vmem:[#allocation6 + $0x378] sm:$0xff]
    %v198 = vld [vmem:[#allocation6 + $0x380] sm:$0xff]
    %v199 = vld [vmem:[#allocation6 + $0x388] sm:$0xff]
    %v200 = vld [vmem:[#allocation6 + $0x390] sm:$0xff]
    %v201 = vld [vmem:[#allocation6 + $0x398] sm:$0xff]
    %v202 = vld [vmem:[#allocation6 + $0x3a0] sm:$0xff]
    %v203 = vld [vmem:[#allocation6 + $0x3a8] sm:$0xff]
    %v204 = vld [vmem:[#allocation6 + $0x3b0] sm:$0xff]
    %v205 = vld [vmem:[#allocation6 + $0x3b8] sm:$0xff]
    %v206 = vld [vmem:[#allocation6 + $0x3c0] sm:$0xff]
    %v207 = vld [vmem:[#allocation6 + $0x3c8] sm:$0xff]
    %v208 = vld [vmem:[#allocation6 + $0x3d0] sm:$0xff]
    %v209 = vld [vmem:[#allocation6 + $0x3d8] sm:$0xff]
    %v210 = vld [vmem:[#allocation6 + $0x3e0] sm:$0xff]
    %v211 = vld [vmem:[#allocation6 + $0x3e8] sm:$0xff]
    %v212 = vld [vmem:[#allocation6 + $0x3f0] sm:$0xff]
    %v213 = vld [vmem:[#allocation6 + $0x3f8] sm:$0xff]
    %v214 = vld [vmem:[#allocation6 + $0x400] sm:$0xff]
    %v215 = vld [vmem:[#allocation6 + $0x408] sm:$0xff]
    %v216 = vld [vmem:[#allocation6 + $0x410] sm:$0xff]
    %v217 = vld [vmem:[#allocation6 + $0x418] sm:$0xff]
    %v218 = vld [vmem:[#allocation6 + $0x420] sm:$0xff]
    %v219 = vld [vmem:[#allocation6 + $0x428] sm:$0xff]
    %v220 = vld [vmem:[#allocation6 + $0x430] sm:$0xff]
    %v221 = vld [vmem:[#allocation6 + $0x438] sm:$0xff]
    %v222 = vld [vmem:[#allocation6 + $0x440] sm:$0xff]
    %v223 = vld [vmem:[#allocation6 + $0x448] sm:$0xff]
    %v224 = vld [vmem:[#allocation6 + $0x450] sm:$0xff]
    %v225 = vld [vmem:[#allocation6 + $0x458] sm:$0xff]
    %v226 = vld [vmem:[#allocation6 + $0x460] sm:$0xff]
    %v227 = vld [vmem:[#allocation6 + $0x468] sm:$0xff]
    %v228 = vld [vmem:[#allocation6 + $0x470] sm:$0xff]
    %v229 = vld [vmem:[#allocation6 + $0x478] sm:$0xff]
    %v230 = vld [vmem:[#allocation6 + $0x480] sm:$0xff]
    %v231 = vld [vmem:[#allocation6 + $0x488] sm:$0xff]
    %v232 = vld [vmem:[#allocation6 + $0x490] sm:$0xff]
    %v233 = vld [vmem:[#allocation6 + $0x498] sm:$0xff]
    %v234 = vld [vmem:[#allocation6 + $0x4a0] sm:$0xff]
    %v235 = vld [vmem:[#allocation6 + $0x4a8] sm:$0xff]
    %v236 = vld [vmem:[#allocation6 + $0x4b0] sm:$0xff]
    %v237 = vld [vmem:[#allocation6 + $0x4b8] sm:$0xff]
    %v238 = vld [vmem:[#allocation6 + $0x4c0] sm:$0xff]
    %v239 = vld [vmem:[#allocation6 + $0x4c8] sm:$0xff]
    %v240 = vld [vmem:[#allocation6 + $0x4d0] sm:$0xff]
    %v241 = vld [vmem:[#allocation6 + $0x4d8] sm:$0xff]
    %v242 = vld [vmem:[#allocation6 + $0x4e0] sm:$0xff]
    %v243 = vld [vmem:[#allocation6 + $0x4e8] sm:$0xff]
    %v244 = vld [vmem:[#allocation6 + $0x4f0] sm:$0xff]
    %v245 = vld [vmem:[#allocation6 + $0x4f8] sm:$0xff]
    %v246 = vld [vmem:[#allocation6 + $0x500] sm:$0xff]
    %v247 = vld [vmem:[#allocation6 + $0x508] sm:$0xff]
    %v248 = vld [vmem:[#allocation6 + $0x510] sm:$0xff]
    %v249 = vld [vmem:[#allocation6 + $0x518] sm:$0xff]
    %v250 = vld [vmem:[#allocation6 + $0x520] sm:$0xff]
    %v251 = vld [vmem:[#allocation6 + $0x528] sm:$0xff]
    %v252 = vld [vmem:[#allocation6 + $0x530] sm:$0xff]
    %v253 = vld [vmem:[#allocation6 + $0x538] sm:$0xff]
    %v254 = vld [vmem:[#allocation6 + $0x540] sm:$0xff]
    %v255 = vld [vmem:[#allocation6 + $0x548] sm:$0xff]
    %v256 = vld [vmem:[#allocation6 + $0x550] sm:$0xff]
    %v257 = vld [vmem:[#allocation6 + $0x558] sm:$0xff]
    %v258 = vld [vmem:[#allocation6 + $0x560] sm:$0xff]
    %v259 = vld [vmem:[#allocation6 + $0x568] sm:$0xff]
    %v260 = vld [vmem:[#allocation6 + $0x570] sm:$0xff]
    %v261 = vld [vmem:[#allocation6 + $0x578] sm:$0xff]
    %v262 = vld [vmem:[#allocation6 + $0x580] sm:$0xff]
    %v263 = vld [vmem:[#allocation6 + $0x588] sm:$0xff]
    %v264 = vld [vmem:[#allocation6 + $0x590] sm:$0xff]
    %v265 = vld [vmem:[#allocation6 + $0x598] sm:$0xff]
    %v266 = vld [vmem:[#allocation6 + $0x5a0] sm:$0xff]
    %v267 = vld [vmem:[#allocation6 + $0x5a8] sm:$0xff]
    %v268 = vld [vmem:[#allocation6 + $0x5b0] sm:$0xff]
    %v269 = vld [vmem:[#allocation6 + $0x5b8] sm:$0xff]
    %v270 = vld [vmem:[#allocation6 + $0x5c0] sm:$0xff]
    %v271 = vld [vmem:[#allocation6 + $0x5c8] sm:$0xff]
    %v272 = vld [vmem:[#allocation6 + $0x5d0] sm:$0xff]
    %v273 = vld [vmem:[#allocation6 + $0x5d8] sm:$0xff]
    %v274 = vld [vmem:[#allocation6 + $0x5e0] sm:$0xff]
    %v275 = vld [vmem:[#allocation6 + $0x5e8] sm:$0xff]
    %v276 = vld [vmem:[#allocation6 + $0x5f0] sm:$0xff]
    %v277 = vld [vmem:[#allocation6 + $0x5f8] sm:$0xff]
    %v278 = vld [vmem:[#allocation6 + $0x600] sm:$0xff]
    %v279 = vld [vmem:[#allocation6 + $0x608] sm:$0xff]
    %v280 = vld [vmem:[#allocation6 + $0x610] sm:$0xff]
    %v281 = vld [vmem:[#allocation6 + $0x618] sm:$0xff]
    %v282 = vld [vmem:[#allocation6 + $0x620] sm:$0xff]
    %v283 = vld [vmem:[#allocation6 + $0x628] sm:$0xff]
    %v284 = vld [vmem:[#allocation6 + $0x630] sm:$0xff]
    %v285 = vld [vmem:[#allocation6 + $0x638] sm:$0xff]
    %v286 = vld [vmem:[#allocation6 + $0x640] sm:$0xff]
    %v287 = vld [vmem:[#allocation6 + $0x648] sm:$0xff]
    %v288 = vld [vmem:[#allocation6 + $0x650] sm:$0xff]
    %v289 = vld [vmem:[#allocation6 + $0x658] sm:$0xff]
    %v290 = vld [vmem:[#allocation6 + $0x660] sm:$0xff]
    %v291 = vld [vmem:[#allocation6 + $0x668] sm:$0xff]
    %v292 = vld [vmem:[#allocation6 + $0x670] sm:$0xff]
    %v293 = vld [vmem:[#allocation6 + $0x678] sm:$0xff]
    %v294 = vld [vmem:[#allocation6 + $0x680] sm:$0xff]
    %v295 = vld [vmem:[#allocation6 + $0x688] sm:$0xff]
    %v296 = vld [vmem:[#allocation6 + $0x690] sm:$0xff]
    %v297 = vld [vmem:[#allocation6 + $0x698] sm:$0xff]
    %v298 = vld [vmem:[#allocation6 + $0x6a0] sm:$0xff]
    %v299 = vld [vmem:[#allocation6 + $0x6a8] sm:$0xff]
    %v300 = vld [vmem:[#allocation6 + $0x6b0] sm:$0xff]
    %v301 = vld [vmem:[#allocation6 + $0x6b8] sm:$0xff]
    %v302 = vld [vmem:[#allocation6 + $0x6c0] sm:$0xff]
    %v303 = vld [vmem:[#allocation6 + $0x6c8] sm:$0xff]
    %v304 = vld [vmem:[#allocation6 + $0x6d0] sm:$0xff]
    %v305 = vld [vmem:[#allocation6 + $0x6d8] sm:$0xff]
    %v306 = vld [vmem:[#allocation6 + $0x6e0] sm:$0xff]
    %v307 = vld [vmem:[#allocation6 + $0x6e8] sm:$0xff]
    %v308 = vld [vmem:[#allocation6 + $0x6f0] sm:$0xff]
    %v309 = vld [vmem:[#allocation6 + $0x6f8] sm:$0xff]
    %v310 = vld [vmem:[#allocation6 + $0x700] sm:$0xff]
    %v311 = vld [vmem:[#allocation6 + $0x708] sm:$0xff]
    %v312 = vld [vmem:[#allocation6 + $0x710] sm:$0xff]
    %v313 = vld [vmem:[#allocation6 + $0x718] sm:$0xff]
    %v314 = vld [vmem:[#allocation6 + $0x720] sm:$0xff]
    %v315 = vld [vmem:[#allocation6 + $0x728] sm:$0xff]
    %v316 = vld [vmem:[#allocation6 + $0x730] sm:$0xff]
    %v317 = vld [vmem:[#allocation6 + $0x738] sm:$0xff]
    %v318 = vld [vmem:[#allocation6 + $0x740] sm:$0xff]
    %v319 = vld [vmem:[#allocation6 + $0x748] sm:$0xff]
    %v320 = vld [vmem:[#allocation6 + $0x750] sm:$0xff]
    %v321 = vld [vmem:[#allocation6 + $0x758] sm:$0xff]
    %v322 = vld [vmem:[#allocation6 + $0x760] sm:$0xff]
    %v323 = vld [vmem:[#allocation6 + $0x768] sm:$0xff]
    %v324 = vld [vmem:[#allocation6 + $0x770] sm:$0xff]
    %v325 = vld [vmem:[#allocation6 + $0x778] sm:$0xff]
    %v326 = vld [vmem:[#allocation6 + $0x780] sm:$0xff]
    %v327 = vld [vmem:[#allocation6 + $0x788] sm:$0xff]
    %v328 = vld [vmem:[#allocation6 + $0x790] sm:$0xff]
    %v329 = vld [vmem:[#allocation6 + $0x798] sm:$0xff]
    %v330 = vld [vmem:[#allocation6 + $0x7a0] sm:$0xff]
    %v331 = vld [vmem:[#allocation6 + $0x7a8] sm:$0xff]
    %v332 = vld [vmem:[#allocation6 + $0x7b0] sm:$0xff]
    %v333 = vld [vmem:[#allocation6 + $0x7b8] sm:$0xff]
    %v334 = vld [vmem:[#allocation6 + $0x7c0] sm:$0xff]
    %v335 = vld [vmem:[#allocation6 + $0x7c8] sm:$0xff]
    %v336 = vld [vmem:[#allocation6 + $0x7d0] sm:$0xff]
    %v337 = vld [vmem:[#allocation6 + $0x7d8] sm:$0xff]
    %v338 = vld [vmem:[#allocation6 + $0x7e0] sm:$0xff]
    %v339 = vld [vmem:[#allocation6 + $0x7e8] sm:$0xff]
    %v340 = vld [vmem:[#allocation6 + $0x7f0] sm:$0xff]
    %v341 = vld [vmem:[#allocation6 + $0x7f8] sm:$0xff]
    %v342 = vld [vmem:[#allocation8] sm:$0xff]
    %v344 = vlaneseq
    %v345 = vshrl.u32 %v344, 7
    %v346 = vsub.s32 0, %v345
    %v347 = vrot.slane %v342, %v346
    %v348 = vlaneseq
    %v349 = vshrl.u32 %v348, 7
    %v350 = vsub.s32 1, %v349
    %v351 = vrot.slane %v342, %v350
    %v352 = vlaneseq
    %v353 = vshrl.u32 %v352, 7
    %v354 = vsub.s32 2, %v353
    %v355 = vrot.slane %v342, %v354
    %v356 = vlaneseq
    %v357 = vshrl.u32 %v356, 7
    %v358 = vsub.s32 3, %v357
    %v359 = vrot.slane %v342, %v358
    %v360 = vlaneseq
    %v361 = vshrl.u32 %v360, 7
    %v362 = vsub.s32 4, %v361
    %v363 = vrot.slane %v342, %v362
    %v364 = vlaneseq
    %v365 = vshrl.u32 %v364, 7
    %v366 = vsub.s32 5, %v365
    %v367 = vrot.slane %v342, %v366
    %v368 = vlaneseq
    %v369 = vshrl.u32 %v368, 7
    %v370 = vsub.s32 6, %v369
    %v371 = vrot.slane %v342, %v370
    %v372 = vlaneseq
    %v373 = vshrl.u32 %v372, 7
    %v374 = vsub.s32 7, %v373
    %v375 = vrot.slane %v342, %v374
    %384 = vmatprep.subr.mxu0 %v87
    %385 = vmatpush1.msra.mxu0 %v86
    %386 = vmatprep.subr.mxu0 %v95
    %387 = vmatpush1.msra.mxu0 %v94
    %388 = vmatprep.subr.mxu0 %v103
    %389 = vmatpush1.msra.mxu0 %v102
    %390 = vmatprep.subr.mxu0 %v111
    %391 = vmatpush1.msra.mxu0 %v110
    %392 = vmatprep.subr.mxu0 %v119
    %393 = vmatpush1.msra.mxu0 %v118
    %394 = vmatprep.subr.mxu0 %v127
    %395 = vmatpush1.msra.mxu0 %v126
    %396 = vmatprep.subr.mxu0 %v135
    %397 = vmatpush1.msra.mxu0 %v134
    %398 = vmatprep.subr.mxu0 %v143
    %399 = vmatpush1.msra.mxu0 %v142
    %400 = vmatprep.subr.mxu0 %v151
    %401 = vmatpush1.msra.mxu0 %v150
    %402 = vmatprep.subr.mxu0 %v159
    %403 = vmatpush1.msra.mxu0 %v158
    %404 = vmatprep.subr.mxu0 %v167
    %405 = vmatpush1.msra.mxu0 %v166
    %406 = vmatprep.subr.mxu0 %v175
    %407 = vmatpush1.msra.mxu0 %v174
    %408 = vmatprep.subr.mxu0 %v183
    %409 = vmatpush1.msra.mxu0 %v182
    %410 = vmatprep.subr.mxu0 %v191
    %411 = vmatpush1.msra.mxu0 %v190
    %412 = vmatprep.subr.mxu0 %v199
    %413 = vmatpush1.msra.mxu0 %v198
    %414 = vmatprep.subr.mxu0 %v207
    %415 = vmatpush1.msra.mxu0 %v206
    %416 = vmatprep.subr.mxu0 %v215
    %417 = vmatpush1.msra.mxu0 %v214
    %418 = vmatprep.subr.mxu0 %v223
    %419 = vmatpush1.msra.mxu0 %v222
    %420 = vmatprep.subr.mxu0 %v231
    %421 = vmatpush1.msra.mxu0 %v230
    %422 = vmatprep.subr.mxu0 %v239
    %423 = vmatpush1.msra.mxu0 %v238
    %424 = vmatprep.subr.mxu0 %v247
    %425 = vmatpush1.msra.mxu0 %v246
    %426 = vmatprep.subr.mxu0 %v255
    %427 = vmatpush1.msra.mxu0 %v254
    %428 = vmatprep.subr.mxu0 %v263
    %429 = vmatpush1.msra.mxu0 %v262
    %430 = vmatprep.subr.mxu0 %v271
    %431 = vmatpush1.msra.mxu0 %v270
    %432 = vmatprep.subr.mxu0 %v279
    %433 = vmatpush1.msra.mxu0 %v278
    %434 = vmatprep.subr.mxu0 %v287
    %435 = vmatpush1.msra.mxu0 %v286
    %436 = vmatprep.subr.mxu0 %v295
    %437 = vmatpush1.msra.mxu0 %v294
    %438 = vmatprep.subr.mxu0 %v303
    %439 = vmatpush1.msra.mxu0 %v302
    %440 = vmatprep.subr.mxu0 %v311
    %441 = vmatpush1.msra.mxu0 %v310
    %442 = vmatprep.subr.mxu0 %v319
    %443 = vmatpush1.msra.mxu0 %v318
    %444 = vmatprep.subr.mxu0 %v327
    %445 = vmatpush1.msra.mxu0 %v326
    %446 = vmatprep.subr.mxu0 %v335
    %447 = vmatpush1.msra.mxu0 %v334
    %448 = vmatprep.mubr.f32.mxu0 %v83
    %449 = vmatmul.mubr.f32.gmra.mrb[0].mxu0 %v82
    %v450 = vpop.f32.mrb[0].mxu0
    %v451 = vadd.f32 %v347, %v450
    %v452 = vpop.f32.mrb[0].mxu0
    %v453 = vadd.f32 %v351, %v452
    %454 = vmatprep.mubr.f32.mxu0 %v85
    %455 = vmatmul.mubr.f32.gmra.mrb[0].mxu0 %v84
    %v456 = vpop.f32.mrb[0].mxu0
    %v457 = vadd.f32 %v347, %v456
    %v458 = vpop.f32.mrb[0].mxu0
    %v459 = vadd.f32 %v351, %v458
    %460 = vdwg.mxu0
    %461 = vmatprep.subr.mxu0 %v89
    %462 = vmatpush1.msra.mxu0 %v88
    %463 = vmatprep.subr.mxu0 %v97
    %464 = vmatpush1.msra.mxu0 %v96
    %465 = vmatprep.subr.mxu0 %v105
    %466 = vmatpush1.msra.mxu0 %v104
    %467 = vmatprep.subr.mxu0 %v113
    %468 = vmatpush1.msra.mxu0 %v112
    %469 = vmatprep.subr.mxu0 %v121
    %470 = vmatpush1.msra.mxu0 %v120
    %471 = vmatprep.subr.mxu0 %v129
    %472 = vmatpush1.msra.mxu0 %v128
    %473 = vmatprep.subr.mxu0 %v137
    %474 = vmatpush1.msra.mxu0 %v136
    %475 = vmatprep.subr.mxu0 %v145
    %476 = vmatpush1.msra.mxu0 %v144
    %477 = vmatprep.subr.mxu0 %v153
    %478 = vmatpush1.msra.mxu0 %v152
    %479 = vmatprep.subr.mxu0 %v161
    %480 = vmatpush1.msra.mxu0 %v160
    %481 = vmatprep.subr.mxu0 %v169
    %482 = vmatpush1.msra.mxu0 %v168
    %483 = vmatprep.subr.mxu0 %v177
    %484 = vmatpush1.msra.mxu0 %v176
    %485 = vmatprep.subr.mxu0 %v185
    %486 = vmatpush1.msra.mxu0 %v184
    %487 = vmatprep.subr.mxu0 %v193
    %488 = vmatpush1.msra.mxu0 %v192
    %489 = vmatprep.subr.mxu0 %v201
    %490 = vmatpush1.msra.mxu0 %v200
    %491 = vmatprep.subr.mxu0 %v209
    %492 = vmatpush1.msra.mxu0 %v208
    %493 = vmatprep.subr.mxu0 %v217
    %494 = vmatpush1.msra.mxu0 %v216
    %495 = vmatprep.subr.mxu0 %v225
    %496 = vmatpush1.msra.mxu0 %v224
    %497 = vmatprep.subr.mxu0 %v233
    %498 = vmatpush1.msra.mxu0 %v232
    %499 = vmatprep.subr.mxu0 %v241
    %500 = vmatpush1.msra.mxu0 %v240
    %501 = vmatprep.subr.mxu0 %v249
    %502 = vmatpush1.msra.mxu0 %v248
    %503 = vmatprep.subr.mxu0 %v257
    %504 = vmatpush1.msra.mxu0 %v256
    %505 = vmatprep.subr.mxu0 %v265
    %506 = vmatpush1.msra.mxu0 %v264
    %507 = vmatprep.subr.mxu0 %v273
    %508 = vmatpush1.msra.mxu0 %v272
    %509 = vmatprep.subr.mxu0 %v281
    %510 = vmatpush1.msra.mxu0 %v280
    %511 = vmatprep.subr.mxu0 %v289
    %512 = vmatpush1.msra.mxu0 %v288
    %513 = vmatprep.subr.mxu0 %v297
    %514 = vmatpush1.msra.mxu0 %v296
    %515 = vmatprep.subr.mxu0 %v305
    %516 = vmatpush1.msra.mxu0 %v304
    %517 = vmatprep.subr.mxu0 %v313
    %518 = vmatpush1.msra.mxu0 %v312
    %519 = vmatprep.subr.mxu0 %v321
    %520 = vmatpush1.msra.mxu0 %v320
    %521 = vmatprep.subr.mxu0 %v329
    %522 = vmatpush1.msra.mxu0 %v328
    %523 = vmatprep.subr.mxu0 %v337
    %524 = vmatpush1.msra.mxu0 %v336
    %525 = vmatprep.mubr.f32.mxu0 %v83
    %526 = vmatmul.mubr.f32.gmra.mrb[0].mxu0 %v82
    %v527 = vpop.f32.mrb[0].mxu0
    %v528 = vadd.f32 %v355, %v527
    %v529 = vpop.f32.mrb[0].mxu0
    %v530 = vadd.f32 %v359, %v529
    %531 = vmatprep.mubr.f32.mxu0 %v85
    %532 = vmatmul.mubr.f32.gmra.mrb[0].mxu0 %v84
    %v533 = vpop.f32.mrb[0].mxu0
    %v534 = vadd.f32 %v355, %v533
    %v535 = vpop.f32.mrb[0].mxu0
    %v536 = vadd.f32 %v359, %v535
    %537 = vdwg.mxu0
    %538 = vmatprep.subr.mxu0 %v91
    %539 = vmatpush1.msra.mxu0 %v90
    %540 = vmatprep.subr.mxu0 %v99
    %541 = vmatpush1.msra.mxu0 %v98
    %542 = vmatprep.subr.mxu0 %v107
    %543 = vmatpush1.msra.mxu0 %v106
    %544 = vmatprep.subr.mxu0 %v115
    %545 = vmatpush1.msra.mxu0 %v114
    %546 = vmatprep.subr.mxu0 %v123
    %547 = vmatpush1.msra.mxu0 %v122
    %548 = vmatprep.subr.mxu0 %v131
    %549 = vmatpush1.msra.mxu0 %v130
    %550 = vmatprep.subr.mxu0 %v139
    %551 = vmatpush1.msra.mxu0 %v138
    %552 = vmatprep.subr.mxu0 %v147
    %553 = vmatpush1.msra.mxu0 %v146
    %554 = vmatprep.subr.mxu0 %v155
    %555 = vmatpush1.msra.mxu0 %v154
    %556 = vmatprep.subr.mxu0 %v163
    %557 = vmatpush1.msra.mxu0 %v162
    %558 = vmatprep.subr.mxu0 %v171
    %559 = vmatpush1.msra.mxu0 %v170
    %560 = vmatprep.subr.mxu0 %v179
    %561 = vmatpush1.msra.mxu0 %v178
    %562 = vmatprep.subr.mxu0 %v187
    %563 = vmatpush1.msra.mxu0 %v186
    %564 = vmatprep.subr.mxu0 %v195
    %565 = vmatpush1.msra.mxu0 %v194
    %566 = vmatprep.subr.mxu0 %v203
    %567 = vmatpush1.msra.mxu0 %v202
    %568 = vmatprep.subr.mxu0 %v211
    %569 = vmatpush1.msra.mxu0 %v210
    %570 = vmatprep.subr.mxu0 %v219
    %571 = vmatpush1.msra.mxu0 %v218
    %572 = vmatprep.subr.mxu0 %v227
    %573 = vmatpush1.msra.mxu0 %v226
    %574 = vmatprep.subr.mxu0 %v235
    %575 = vmatpush1.msra.mxu0 %v234
    %576 = vmatprep.subr.mxu0 %v243
    %577 = vmatpush1.msra.mxu0 %v242
    %578 = vmatprep.subr.mxu0 %v251
    %579 = vmatpush1.msra.mxu0 %v250
    %580 = vmatprep.subr.mxu0 %v259
    %581 = vmatpush1.msra.mxu0 %v258
    %582 = vmatprep.subr.mxu0 %v267
    %583 = vmatpush1.msra.mxu0 %v266
    %584 = vmatprep.subr.mxu0 %v275
    %585 = vmatpush1.msra.mxu0 %v274
    %586 = vmatprep.subr.mxu0 %v283
    %587 = vmatpush1.msra.mxu0 %v282
    %588 = vmatprep.subr.mxu0 %v291
    %589 = vmatpush1.msra.mxu0 %v290
    %590 = vmatprep.subr.mxu0 %v299
    %591 = vmatpush1.msra.mxu0 %v298
    %592 = vmatprep.subr.mxu0 %v307
    %593 = vmatpush1.msra.mxu0 %v306
    %594 = vmatprep.subr.mxu0 %v315
    %595 = vmatpush1.msra.mxu0 %v314
    %596 = vmatprep.subr.mxu0 %v323
    %597 = vmatpush1.msra.mxu0 %v322
    %598 = vmatprep.subr.mxu0 %v331
    %599 = vmatpush1.msra.mxu0 %v330
    %600 = vmatprep.subr.mxu0 %v339
    %601 = vmatpush1.msra.mxu0 %v338
    %602 = vmatprep.mubr.f32.mxu0 %v83
    %603 = vmatmul.mubr.f32.gmra.mrb[0].mxu0 %v82
    %v604 = vpop.f32.mrb[0].mxu0
    %v605 = vadd.f32 %v363, %v604
    %v606 = vpop.f32.mrb[0].mxu0
    %v607 = vadd.f32 %v367, %v606
    %608 = vmatprep.mubr.f32.mxu0 %v85
    %609 = vmatmul.mubr.f32.gmra.mrb[0].mxu0 %v84
    %v610 = vpop.f32.mrb[0].mxu0
    %v611 = vadd.f32 %v363, %v610
    %v612 = vpop.f32.mrb[0].mxu0
    %v613 = vadd.f32 %v367, %v612
    %614 = vdwg.mxu0
    %615 = vmatprep.subr.mxu0 %v93
    %616 = vmatpush1.msra.mxu0 %v92
    %617 = vmatprep.subr.mxu0 %v101
    %618 = vmatpush1.msra.mxu0 %v100
    %619 = vmatprep.subr.mxu0 %v109
    %620 = vmatpush1.msra.mxu0 %v108
    %621 = vmatprep.subr.mxu0 %v117
    %622 = vmatpush1.msra.mxu0 %v116
    %623 = vmatprep.subr.mxu0 %v125
    %624 = vmatpush1.msra.mxu0 %v124
    %625 = vmatprep.subr.mxu0 %v133
    %626 = vmatpush1.msra.mxu0 %v132
    %627 = vmatprep.subr.mxu0 %v141
    %628 = vmatpush1.msra.mxu0 %v140
    %629 = vmatprep.subr.mxu0 %v149
    %630 = vmatpush1.msra.mxu0 %v148
    %631 = vmatprep.subr.mxu0 %v157
    %632 = vmatpush1.msra.mxu0 %v156
    %633 = vmatprep.subr.mxu0 %v165
    %634 = vmatpush1.msra.mxu0 %v164
    %635 = vmatprep.subr.mxu0 %v173
    %636 = vmatpush1.msra.mxu0 %v172
    %637 = vmatprep.subr.mxu0 %v181
    %638 = vmatpush1.msra.mxu0 %v180
    %639 = vmatprep.subr.mxu0 %v189
    %640 = vmatpush1.msra.mxu0 %v188
    %641 = vmatprep.subr.mxu0 %v197
    %642 = vmatpush1.msra.mxu0 %v196
    %643 = vmatprep.subr.mxu0 %v205
    %644 = vmatpush1.msra.mxu0 %v204
    %645 = vmatprep.subr.mxu0 %v213
    %646 = vmatpush1.msra.mxu0 %v212
    %647 = vmatprep.subr.mxu0 %v221
    %648 = vmatpush1.msra.mxu0 %v220
    %649 = vmatprep.subr.mxu0 %v229
    %650 = vmatpush1.msra.mxu0 %v228
    %651 = vmatprep.subr.mxu0 %v237
    %652 = vmatpush1.msra.mxu0 %v236
    %653 = vmatprep.subr.mxu0 %v245
    %654 = vmatpush1.msra.mxu0 %v244
    %655 = vmatprep.subr.mxu0 %v253
    %656 = vmatpush1.msra.mxu0 %v252
    %657 = vmatprep.subr.mxu0 %v261
    %658 = vmatpush1.msra.mxu0 %v260
    %659 = vmatprep.subr.mxu0 %v269
    %660 = vmatpush1.msra.mxu0 %v268
    %661 = vmatprep.subr.mxu0 %v277
    %662 = vmatpush1.msra.mxu0 %v276
    %663 = vmatprep.subr.mxu0 %v285
    %664 = vmatpush1.msra.mxu0 %v284
    %665 = vmatprep.subr.mxu0 %v293
    %666 = vmatpush1.msra.mxu0 %v292
    %667 = vmatprep.subr.mxu0 %v301
    %668 = vmatpush1.msra.mxu0 %v300
    %669 = vmatprep.subr.mxu0 %v309
    %670 = vmatpush1.msra.mxu0 %v308
    %671 = vmatprep.subr.mxu0 %v317
    %672 = vmatpush1.msra.mxu0 %v316
    %673 = vmatprep.subr.mxu0 %v325
    %674 = vmatpush1.msra.mxu0 %v324
    %675 = vmatprep.subr.mxu0 %v333
    %676 = vmatpush1.msra.mxu0 %v332
    %677 = vmatprep.subr.mxu0 %v341
    %678 = vmatpush1.msra.mxu0 %v340
    %679 = vmatprep.mubr.f32.mxu0 %v83
    %680 = vmatmul.mubr.f32.gmra.mrb[0].mxu0 %v82
    %v681 = vpop.f32.mrb[0].mxu0
    %v682 = vadd.f32 %v371, %v681
    %v683 = vpop.f32.mrb[0].mxu0
    %v684 = vadd.f32 %v375, %v683
    %685 = vmatprep.mubr.f32.mxu0 %v85
    %686 = vmatmul.mubr.f32.gmra.mrb[0].mxu0 %v84
    %v687 = vpop.f32.mrb[0].mxu0
    %v688 = vadd.f32 %v371, %v687
    %v689 = vpop.f32.mrb[0].mxu0
    %v690 = vadd.f32 %v375, %v689
    %691 = vdwg.mxu0
    %v692 = vmax.f32 %v451, 0.0
    %v693 = vmax.f32 %v453, 0.0
    %v694 = vmax.f32 %v528, 0.0
    %v695 = vmax.f32 %v530, 0.0
    %v696 = vmax.f32 %v605, 0.0
    %v697 = vmax.f32 %v607, 0.0
    %v698 = vmax.f32 %v682, 0.0
    %v699 = vmax.f32 %v684, 0.0
    %v700 = vmax.f32 %v457, 0.0
    %v701 = vmax.f32 %v459, 0.0
    %v702 = vmax.f32 %v534, 0.0
    %v703 = vmax.f32 %v536, 0.0
    %v704 = vmax.f32 %v611, 0.0
    %v705 = vmax.f32 %v613, 0.0
    %v706 = vmax.f32 %v688, 0.0
    %v707 = vmax.f32 %v690, 0.0
    %v708 = vld [vmem:[#allocation2] sm:$0xff]
    %v709 = vld [vmem:[#allocation2 + $0x8] sm:$0xff]
    %v710 = vld [vmem:[#allocation2 + $0x10] sm:$0xff]
    %v711 = vld [vmem:[#allocation2 + $0x18] sm:$0xff]
    %v712 = vld [vmem:[#allocation9] sm:$0xff]
    %v713 = vld [vmem:[#allocation9 + $0x8] sm:$0xff]
    %v714 = vld [vmem:[#allocation9 + $0x10] sm:$0xff]
    %v715 = vld [vmem:[#allocation9 + $0x18] sm:$0xff]
    %v716 = vld [vmem:[#allocation9 + $0x20] sm:$0xff]
    %v717 = vld [vmem:[#allocation9 + $0x28] sm:$0xff]
    %v718 = vld [vmem:[#allocation9 + $0x30] sm:$0xff]
    %v719 = vld [vmem:[#allocation9 + $0x38] sm:$0xff]
    %v720 = vld [vmem:[#allocation9 + $0x40] sm:$0xff]
    %v721 = vld [vmem:[#allocation9 + $0x48] sm:$0xff]
    %v722 = vld [vmem:[#allocation9 + $0x50] sm:$0xff]
    %v723 = vld [vmem:[#allocation9 + $0x58] sm:$0xff]
    %v724 = vld [vmem:[#allocation9 + $0x60] sm:$0xff]
    %v725 = vld [vmem:[#allocation9 + $0x68] sm:$0xff]
    %v726 = vld [vmem:[#allocation9 + $0x70] sm:$0xff]
    %v727 = vld [vmem:[#allocation9 + $0x78] sm:$0xff]
    %v728 = vld [vmem:[#allocation9 + $0x80] sm:$0xff]
    %v729 = vld [vmem:[#allocation9 + $0x88] sm:$0xff]
    %v730 = vld [vmem:[#allocation9 + $0x90] sm:$0xff]
    %v731 = vld [vmem:[#allocation9 + $0x98] sm:$0xff]
    %v732 = vld [vmem:[#allocation9 + $0xa0] sm:$0xff]
    %v733 = vld [vmem:[#allocation9 + $0xa8] sm:$0xff]
    %v734 = vld [vmem:[#allocation9 + $0xb0] sm:$0xff]
    %v735 = vld [vmem:[#allocation9 + $0xb8] sm:$0xff]
    %v736 = vld [vmem:[#allocation9 + $0xc0] sm:$0xff]
    %v737 = vld [vmem:[#allocation9 + $0xc8] sm:$0xff]
    %v738 = vld [vmem:[#allocation9 + $0xd0] sm:$0xff]
    %v739 = vld [vmem:[#allocation9 + $0xd8] sm:$0xff]
    %v740 = vld [vmem:[#allocation9 + $0xe0] sm:$0xff]
    %v741 = vld [vmem:[#allocation9 + $0xe8] sm:$0xff]
    %v742 = vld [vmem:[#allocation9 + $0xf0] sm:$0xff]
    %v743 = vld [vmem:[#allocation9 + $0xf8] sm:$0xff]
    %v744 = vld [vmem:[#allocation9 + $0x100] sm:$0xff]
    %v745 = vld [vmem:[#allocation9 + $0x108] sm:$0xff]
    %v746 = vld [vmem:[#allocation9 + $0x110] sm:$0xff]
    %v747 = vld [vmem:[#allocation9 + $0x118] sm:$0xff]
    %v748 = vld [vmem:[#allocation9 + $0x120] sm:$0xff]
    %v749 = vld [vmem:[#allocation9 + $0x128] sm:$0xff]
    %v750 = vld [vmem:[#allocation9 + $0x130] sm:$0xff]
    %v751 = vld [vmem:[#allocation9 + $0x138] sm:$0xff]
    %v752 = vld [vmem:[#allocation9 + $0x140] sm:$0xff]
    %v753 = vld [vmem:[#allocation9 + $0x148] sm:$0xff]
    %v754 = vld [vmem:[#allocation9 + $0x150] sm:$0xff]
    %v755 = vld [vmem:[#allocation9 + $0x158] sm:$0xff]
    %v756 = vld [vmem:[#allocation9 + $0x160] sm:$0xff]
    %v757 = vld [vmem:[#allocation9 + $0x168] sm:$0xff]
    %v758 = vld [vmem:[#allocation9 + $0x170] sm:$0xff]
    %v759 = vld [vmem:[#allocation9 + $0x178] sm:$0xff]
    %v760 = vld [vmem:[#allocation9 + $0x180] sm:$0xff]
    %v761 = vld [vmem:[#allocation9 + $0x188] sm:$0xff]
    %v762 = vld [vmem:[#allocation9 + $0x190] sm:$0xff]
    %v763 = vld [vmem:[#allocation9 + $0x198] sm:$0xff]
    %v764 = vld [vmem:[#allocation9 + $0x1a0] sm:$0xff]
    %v765 = vld [vmem:[#allocation9 + $0x1a8] sm:$0xff]
    %v766 = vld [vmem:[#allocation9 + $0x1b0] sm:$0xff]
    %v767 = vld [vmem:[#allocation9 + $0x1b8] sm:$0xff]
    %v768 = vld [vmem:[#allocation9 + $0x1c0] sm:$0xff]
    %v769 = vld [vmem:[#allocation9 + $0x1c8] sm:$0xff]
    %v770 = vld [vmem:[#allocation9 + $0x1d0] sm:$0xff]
    %v771 = vld [vmem:[#allocation9 + $0x1d8] sm:$0xff]
    %v772 = vld [vmem:[#allocation9 + $0x1e0] sm:$0xff]
    %v773 = vld [vmem:[#allocation9 + $0x1e8] sm:$0xff]
    %v774 = vld [vmem:[#allocation9 + $0x1f0] sm:$0xff]
    %v775 = vld [vmem:[#allocation9 + $0x1f8] sm:$0xff]
    %v776 = vld [vmem:[#allocation9 + $0x200] sm:$0xff]
    %v777 = vld [vmem:[#allocation9 + $0x208] sm:$0xff]
    %v778 = vld [vmem:[#allocation9 + $0x210] sm:$0xff]
    %v779 = vld [vmem:[#allocation9 + $0x218] sm:$0xff]
    %v780 = vld [vmem:[#allocation9 + $0x220] sm:$0xff]
    %v781 = vld [vmem:[#allocation9 + $0x228] sm:$0xff]
    %v782 = vld [vmem:[#allocation9 + $0x230] sm:$0xff]
    %v783 = vld [vmem:[#allocation9 + $0x238] sm:$0xff]
    %v784 = vld [vmem:[#allocation9 + $0x240] sm:$0xff]
    %v785 = vld [vmem:[#allocation9 + $0x248] sm:$0xff]
    %v786 = vld [vmem:[#allocation9 + $0x250] sm:$0xff]
    %v787 = vld [vmem:[#allocation9 + $0x258] sm:$0xff]
    %v788 = vld [vmem:[#allocation9 + $0x260] sm:$0xff]
    %v789 = vld [vmem:[#allocation9 + $0x268] sm:$0xff]
    %v790 = vld [vmem:[#allocation9 + $0x270] sm:$0xff]
    %v791 = vld [vmem:[#allocation9 + $0x278] sm:$0xff]
    %v792 = vld [vmem:[#allocation9 + $0x280] sm:$0xff]
    %v793 = vld [vmem:[#allocation9 + $0x288] sm:$0xff]
    %v794 = vld [vmem:[#allocation9 + $0x290] sm:$0xff]
    %v795 = vld [vmem:[#allocation9 + $0x298] sm:$0xff]
    %v796 = vld [vmem:[#allocation9 + $0x2a0] sm:$0xff]
    %v797 = vld [vmem:[#allocation9 + $0x2a8] sm:$0xff]
    %v798 = vld [vmem:[#allocation9 + $0x2b0] sm:$0xff]
    %v799 = vld [vmem:[#allocation9 + $0x2b8] sm:$0xff]
    %v800 = vld [vmem:[#allocation9 + $0x2c0] sm:$0xff]
    %v801 = vld [vmem:[#allocation9 + $0x2c8] sm:$0xff]
    %v802 = vld [vmem:[#allocation9 + $0x2d0] sm:$0xff]
    %v803 = vld [vmem:[#allocation9 + $0x2d8] sm:$0xff]
    %v804 = vld [vmem:[#allocation9 + $0x2e0] sm:$0xff]
    %v805 = vld [vmem:[#allocation9 + $0x2e8] sm:$0xff]
    %v806 = vld [vmem:[#allocation9 + $0x2f0] sm:$0xff]
    %v807 = vld [vmem:[#allocation9 + $0x2f8] sm:$0xff]
    %v808 = vld [vmem:[#allocation9 + $0x300] sm:$0xff]
    %v809 = vld [vmem:[#allocation9 + $0x308] sm:$0xff]
    %v810 = vld [vmem:[#allocation9 + $0x310] sm:$0xff]
    %v811 = vld [vmem:[#allocation9 + $0x318] sm:$0xff]
    %v812 = vld [vmem:[#allocation9 + $0x320] sm:$0xff]
    %v813 = vld [vmem:[#allocation9 + $0x328] sm:$0xff]
    %v814 = vld [vmem:[#allocation9 + $0x330] sm:$0xff]
    %v815 = vld [vmem:[#allocation9 + $0x338] sm:$0xff]
    %v816 = vld [vmem:[#allocation9 + $0x340] sm:$0xff]
    %v817 = vld [vmem:[#allocation9 + $0x348] sm:$0xff]
    %v818 = vld [vmem:[#allocation9 + $0x350] sm:$0xff]
    %v819 = vld [vmem:[#allocation9 + $0x358] sm:$0xff]
    %v820 = vld [vmem:[#allocation9 + $0x360] sm:$0xff]
    %v821 = vld [vmem:[#allocation9 + $0x368] sm:$0xff]
    %v822 = vld [vmem:[#allocation9 + $0x370] sm:$0xff]
    %v823 = vld [vmem:[#allocation9 + $0x378] sm:$0xff]
    %v824 = vld [vmem:[#allocation9 + $0x380] sm:$0xff]
    %v825 = vld [vmem:[#allocation9 + $0x388] sm:$0xff]
    %v826 = vld [vmem:[#allocation9 + $0x390] sm:$0xff]
    %v827 = vld [vmem:[#allocation9 + $0x398] sm:$0xff]
    %v828 = vld [vmem:[#allocation9 + $0x3a0] sm:$0xff]
    %v829 = vld [vmem:[#allocation9 + $0x3a8] sm:$0xff]
    %v830 = vld [vmem:[#allocation9 + $0x3b0] sm:$0xff]
    %v831 = vld [vmem:[#allocation9 + $0x3b8] sm:$0xff]
    %v832 = vld [vmem:[#allocation9 + $0x3c0] sm:$0xff]
    %v833 = vld [vmem:[#allocation9 + $0x3c8] sm:$0xff]
    %v834 = vld [vmem:[#allocation9 + $0x3d0] sm:$0xff]
    %v835 = vld [vmem:[#allocation9 + $0x3d8] sm:$0xff]
    %v836 = vld [vmem:[#allocation9 + $0x3e0] sm:$0xff]
    %v837 = vld [vmem:[#allocation9 + $0x3e8] sm:$0xff]
    %v838 = vld [vmem:[#allocation9 + $0x3f0] sm:$0xff]
    %v839 = vld [vmem:[#allocation9 + $0x3f8] sm:$0xff]
    %v840 = vld [vmem:[#allocation9 + $0x400] sm:$0xff]
    %v841 = vld [vmem:[#allocation9 + $0x408] sm:$0xff]
    %v842 = vld [vmem:[#allocation9 + $0x410] sm:$0xff]
    %v843 = vld [vmem:[#allocation9 + $0x418] sm:$0xff]
    %v844 = vld [vmem:[#allocation9 + $0x420] sm:$0xff]
    %v845 = vld [vmem:[#allocation9 + $0x428] sm:$0xff]
    %v846 = vld [vmem:[#allocation9 + $0x430] sm:$0xff]
    %v847 = vld [vmem:[#allocation9 + $0x438] sm:$0xff]
    %v848 = vld [vmem:[#allocation9 + $0x440] sm:$0xff]
    %v849 = vld [vmem:[#allocation9 + $0x448] sm:$0xff]
    %v850 = vld [vmem:[#allocation9 + $0x450] sm:$0xff]
    %v851 = vld [vmem:[#allocation9 + $0x458] sm:$0xff]
    %v852 = vld [vmem:[#allocation9 + $0x460] sm:$0xff]
    %v853 = vld [vmem:[#allocation9 + $0x468] sm:$0xff]
    %v854 = vld [vmem:[#allocation9 + $0x470] sm:$0xff]
    %v855 = vld [vmem:[#allocation9 + $0x478] sm:$0xff]
    %v856 = vld [vmem:[#allocation9 + $0x480] sm:$0xff]
    %v857 = vld [vmem:[#allocation9 + $0x488] sm:$0xff]
    %v858 = vld [vmem:[#allocation9 + $0x490] sm:$0xff]
    %v859 = vld [vmem:[#allocation9 + $0x498] sm:$0xff]
    %v860 = vld [vmem:[#allocation9 + $0x4a0] sm:$0xff]
    %v861 = vld [vmem:[#allocation9 + $0x4a8] sm:$0xff]
    %v862 = vld [vmem:[#allocation9 + $0x4b0] sm:$0xff]
    %v863 = vld [vmem:[#allocation9 + $0x4b8] sm:$0xff]
    %v864 = vld [vmem:[#allocation9 + $0x4c0] sm:$0xff]
    %v865 = vld [vmem:[#allocation9 + $0x4c8] sm:$0xff]
    %v866 = vld [vmem:[#allocation9 + $0x4d0] sm:$0xff]
    %v867 = vld [vmem:[#allocation9 + $0x4d8] sm:$0xff]
    %v868 = vld [vmem:[#allocation9 + $0x4e0] sm:$0xff]
    %v869 = vld [vmem:[#allocation9 + $0x4e8] sm:$0xff]
    %v870 = vld [vmem:[#allocation9 + $0x4f0] sm:$0xff]
    %v871 = vld [vmem:[#allocation9 + $0x4f8] sm:$0xff]
    %v872 = vld [vmem:[#allocation9 + $0x500] sm:$0xff]
    %v873 = vld [vmem:[#allocation9 + $0x508] sm:$0xff]
    %v874 = vld [vmem:[#allocation9 + $0x510] sm:$0xff]
    %v875 = vld [vmem:[#allocation9 + $0x518] sm:$0xff]
    %v876 = vld [vmem:[#allocation9 + $0x520] sm:$0xff]
    %v877 = vld [vmem:[#allocation9 + $0x528] sm:$0xff]
    %v878 = vld [vmem:[#allocation9 + $0x530] sm:$0xff]
    %v879 = vld [vmem:[#allocation9 + $0x538] sm:$0xff]
    %v880 = vld [vmem:[#allocation9 + $0x540] sm:$0xff]
    %v881 = vld [vmem:[#allocation9 + $0x548] sm:$0xff]
    %v882 = vld [vmem:[#allocation9 + $0x550] sm:$0xff]
    %v883 = vld [vmem:[#allocation9 + $0x558] sm:$0xff]
    %v884 = vld [vmem:[#allocation9 + $0x560] sm:$0xff]
    %v885 = vld [vmem:[#allocation9 + $0x568] sm:$0xff]
    %v886 = vld [vmem:[#allocation9 + $0x570] sm:$0xff]
    %v887 = vld [vmem:[#allocation9 + $0x578] sm:$0xff]
    %v888 = vld [vmem:[#allocation9 + $0x580] sm:$0xff]
    %v889 = vld [vmem:[#allocation9 + $0x588] sm:$0xff]
    %v890 = vld [vmem:[#allocation9 + $0x590] sm:$0xff]
    %v891 = vld [vmem:[#allocation9 + $0x598] sm:$0xff]
    %v892 = vld [vmem:[#allocation9 + $0x5a0] sm:$0xff]
    %v893 = vld [vmem:[#allocation9 + $0x5a8] sm:$0xff]
    %v894 = vld [vmem:[#allocation9 + $0x5b0] sm:$0xff]
    %v895 = vld [vmem:[#allocation9 + $0x5b8] sm:$0xff]
    %v896 = vld [vmem:[#allocation9 + $0x5c0] sm:$0xff]
    %v897 = vld [vmem:[#allocation9 + $0x5c8] sm:$0xff]
    %v898 = vld [vmem:[#allocation9 + $0x5d0] sm:$0xff]
    %v899 = vld [vmem:[#allocation9 + $0x5d8] sm:$0xff]
    %v900 = vld [vmem:[#allocation9 + $0x5e0] sm:$0xff]
    %v901 = vld [vmem:[#allocation9 + $0x5e8] sm:$0xff]
    %v902 = vld [vmem:[#allocation9 + $0x5f0] sm:$0xff]
    %v903 = vld [vmem:[#allocation9 + $0x5f8] sm:$0xff]
    %v904 = vld [vmem:[#allocation9 + $0x600] sm:$0xff]
    %v905 = vld [vmem:[#allocation9 + $0x608] sm:$0xff]
    %v906 = vld [vmem:[#allocation9 + $0x610] sm:$0xff]
    %v907 = vld [vmem:[#allocation9 + $0x618] sm:$0xff]
    %v908 = vld [vmem:[#allocation9 + $0x620] sm:$0xff]
    %v909 = vld [vmem:[#allocation9 + $0x628] sm:$0xff]
    %v910 = vld [vmem:[#allocation9 + $0x630] sm:$0xff]
    %v911 = vld [vmem:[#allocation9 + $0x638] sm:$0xff]
    %v912 = vld [vmem:[#allocation9 + $0x640] sm:$0xff]
    %v913 = vld [vmem:[#allocation9 + $0x648] sm:$0xff]
    %v914 = vld [vmem:[#allocation9 + $0x650] sm:$0xff]
    %v915 = vld [vmem:[#allocation9 + $0x658] sm:$0xff]
    %v916 = vld [vmem:[#allocation9 + $0x660] sm:$0xff]
    %v917 = vld [vmem:[#allocation9 + $0x668] sm:$0xff]
    %v918 = vld [vmem:[#allocation9 + $0x670] sm:$0xff]
    %v919 = vld [vmem:[#allocation9 + $0x678] sm:$0xff]
    %v920 = vld [vmem:[#allocation9 + $0x680] sm:$0xff]
    %v921 = vld [vmem:[#allocation9 + $0x688] sm:$0xff]
    %v922 = vld [vmem:[#allocation9 + $0x690] sm:$0xff]
    %v923 = vld [vmem:[#allocation9 + $0x698] sm:$0xff]
    %v924 = vld [vmem:[#allocation9 + $0x6a0] sm:$0xff]
    %v925 = vld [vmem:[#allocation9 + $0x6a8] sm:$0xff]
    %v926 = vld [vmem:[#allocation9 + $0x6b0] sm:$0xff]
    %v927 = vld [vmem:[#allocation9 + $0x6b8] sm:$0xff]
    %v928 = vld [vmem:[#allocation9 + $0x6c0] sm:$0xff]
    %v929 = vld [vmem:[#allocation9 + $0x6c8] sm:$0xff]
    %v930 = vld [vmem:[#allocation9 + $0x6d0] sm:$0xff]
    %v931 = vld [vmem:[#allocation9 + $0x6d8] sm:$0xff]
    %v932 = vld [vmem:[#allocation9 + $0x6e0] sm:$0xff]
    %v933 = vld [vmem:[#allocation9 + $0x6e8] sm:$0xff]
    %v934 = vld [vmem:[#allocation9 + $0x6f0] sm:$0xff]
    %v935 = vld [vmem:[#allocation9 + $0x6f8] sm:$0xff]
    %v936 = vld [vmem:[#allocation9 + $0x700] sm:$0xff]
    %v937 = vld [vmem:[#allocation9 + $0x708] sm:$0xff]
    %v938 = vld [vmem:[#allocation9 + $0x710] sm:$0xff]
    %v939 = vld [vmem:[#allocation9 + $0x718] sm:$0xff]
    %v940 = vld [vmem:[#allocation9 + $0x720] sm:$0xff]
    %v941 = vld [vmem:[#allocation9 + $0x728] sm:$0xff]
    %v942 = vld [vmem:[#allocation9 + $0x730] sm:$0xff]
    %v943 = vld [vmem:[#allocation9 + $0x738] sm:$0xff]
    %v944 = vld [vmem:[#allocation9 + $0x740] sm:$0xff]
    %v945 = vld [vmem:[#allocation9 + $0x748] sm:$0xff]
    %v946 = vld [vmem:[#allocation9 + $0x750] sm:$0xff]
    %v947 = vld [vmem:[#allocation9 + $0x758] sm:$0xff]
    %v948 = vld [vmem:[#allocation9 + $0x760] sm:$0xff]
    %v949 = vld [vmem:[#allocation9 + $0x768] sm:$0xff]
    %v950 = vld [vmem:[#allocation9 + $0x770] sm:$0xff]
    %v951 = vld [vmem:[#allocation9 + $0x778] sm:$0xff]
    %v952 = vld [vmem:[#allocation9 + $0x780] sm:$0xff]
    %v953 = vld [vmem:[#allocation9 + $0x788] sm:$0xff]
    %v954 = vld [vmem:[#allocation9 + $0x790] sm:$0xff]
    %v955 = vld [vmem:[#allocation9 + $0x798] sm:$0xff]
    %v956 = vld [vmem:[#allocation9 + $0x7a0] sm:$0xff]
    %v957 = vld [vmem:[#allocation9 + $0x7a8] sm:$0xff]
    %v958 = vld [vmem:[#allocation9 + $0x7b0] sm:$0xff]
    %v959 = vld [vmem:[#allocation9 + $0x7b8] sm:$0xff]
    %v960 = vld [vmem:[#allocation9 + $0x7c0] sm:$0xff]
    %v961 = vld [vmem:[#allocation9 + $0x7c8] sm:$0xff]
    %v962 = vld [vmem:[#allocation9 + $0x7d0] sm:$0xff]
    %v963 = vld [vmem:[#allocation9 + $0x7d8] sm:$0xff]
    %v964 = vld [vmem:[#allocation9 + $0x7e0] sm:$0xff]
    %v965 = vld [vmem:[#allocation9 + $0x7e8] sm:$0xff]
    %v966 = vld [vmem:[#allocation9 + $0x7f0] sm:$0xff]
    %v967 = vld [vmem:[#allocation9 + $0x7f8] sm:$0xff]
    %968 = vmatprep.subr.mxu0 %v713
    %969 = vmatpush1.msra.mxu0 %v712
    %970 = vmatprep.subr.mxu0 %v715
    %971 = vmatpush1.msra.mxu0 %v714
    %972 = vmatprep.subr.mxu0 %v717
    %973 = vmatpush1.msra.mxu0 %v716
    %974 = vmatprep.subr.mxu0 %v719
    %975 = vmatpush1.msra.mxu0 %v718
    %976 = vmatprep.subr.mxu0 %v721
    %977 = vmatpush1.msra.mxu0 %v720
    %978 = vmatprep.subr.mxu0 %v723
    %979 = vmatpush1.msra.mxu0 %v722
    %980 = vmatprep.subr.mxu0 %v725
    %981 = vmatpush1.msra.mxu0 %v724
    %982 = vmatprep.subr.mxu0 %v727
    %983 = vmatpush1.msra.mxu0 %v726
    %984 = vmatprep.subr.mxu0 %v729
    %985 = vmatpush1.msra.mxu0 %v728
    %986 = vmatprep.subr.mxu0 %v731
    %987 = vmatpush1.msra.mxu0 %v730
    %988 = vmatprep.subr.mxu0 %v733
    %989 = vmatpush1.msra.mxu0 %v732
    %990 = vmatprep.subr.mxu0 %v735
    %991 = vmatpush1.msra.mxu0 %v734
    %992 = vmatprep.subr.mxu0 %v737
    %993 = vmatpush1.msra.mxu0 %v736
    %994 = vmatprep.subr.mxu0 %v739
    %995 = vmatpush1.msra.mxu0 %v738
    %996 = vmatprep.subr.mxu0 %v741
    %997 = vmatpush1.msra.mxu0 %v740
    %998 = vmatprep.subr.mxu0 %v743
    %999 = vmatpush1.msra.mxu0 %v742
    %1000 = vmatprep.subr.mxu0 %v745
    %1001 = vmatpush1.msra.mxu0 %v744
    %1002 = vmatprep.subr.mxu0 %v747
    %1003 = vmatpush1.msra.mxu0 %v746
    %1004 = vmatprep.subr.mxu0 %v749
    %1005 = vmatpush1.msra.mxu0 %v748
    %1006 = vmatprep.subr.mxu0 %v751
    %1007 = vmatpush1.msra.mxu0 %v750
    %1008 = vmatprep.subr.mxu0 %v753
    %1009 = vmatpush1.msra.mxu0 %v752
    %1010 = vmatprep.subr.mxu0 %v755
    %1011 = vmatpush1.msra.mxu0 %v754
    %1012 = vmatprep.subr.mxu0 %v757
    %1013 = vmatpush1.msra.mxu0 %v756
    %1014 = vmatprep.subr.mxu0 %v759
    %1015 = vmatpush1.msra.mxu0 %v758
    %1016 = vmatprep.subr.mxu0 %v761
    %1017 = vmatpush1.msra.mxu0 %v760
    %1018 = vmatprep.subr.mxu0 %v763
    %1019 = vmatpush1.msra.mxu0 %v762
    %1020 = vmatprep.subr.mxu0 %v765
    %1021 = vmatpush1.msra.mxu0 %v764
    %1022 = vmatprep.subr.mxu0 %v767
    %1023 = vmatpush1.msra.mxu0 %v766
    %1024 = vmatprep.subr.mxu0 %v769
    %1025 = vmatpush1.msra.mxu0 %v768
    %1026 = vmatprep.subr.mxu0 %v771
    %1027 = vmatpush1.msra.mxu0 %v770
    %1028 = vmatprep.subr.mxu0 %v773
    %1029 = vmatpush1.msra.mxu0 %v772
    %1030 = vmatprep.subr.mxu0 %v775
    %1031 = vmatpush1.msra.mxu0 %v774
    %1032 = vmatprep.mubr.f32.mxu0 %v693
    %1033 = vmatmul.mubr.f32.gmra.mrb[0].mxu0 %v692
    %v1034 = vpop.f32.mrb[0].mxu0
    %v1035 = vadd.f32 0.0, %v1034
    %v1036 = vpop.f32.mrb[0].mxu0
    %v1037 = vadd.f32 0.0, %v1036
    %1038 = vmatprep.mubr.f32.mxu0 %v701
    %1039 = vmatmul.mubr.f32.gmra.mrb[0].mxu0 %v700
    %v1040 = vpop.f32.mrb[0].mxu0
    %v1041 = vadd.f32 0.0, %v1040
    %v1042 = vpop.f32.mrb[0].mxu0
    %v1043 = vadd.f32 0.0, %v1042
    %1044 = vdwg.mxu0
    %1045 = vmatprep.subr.mxu0 %v777
    %1046 = vmatpush1.msra.mxu0 %v776
    %1047 = vmatprep.subr.mxu0 %v779
    %1048 = vmatpush1.msra.mxu0 %v778
    %1049 = vmatprep.subr.mxu0 %v781
    %1050 = vmatpush1.msra.mxu0 %v780
    %1051 = vmatprep.subr.mxu0 %v783
    %1052 = vmatpush1.msra.mxu0 %v782
    %1053 = vmatprep.subr.mxu0 %v785
    %1054 = vmatpush1.msra.mxu0 %v784
    %1055 = vmatprep.subr.mxu0 %v787
    %1056 = vmatpush1.msra.mxu0 %v786
    %1057 = vmatprep.subr.mxu0 %v789
    %1058 = vmatpush1.msra.mxu0 %v788
    %1059 = vmatprep.subr.mxu0 %v791
    %1060 = vmatpush1.msra.mxu0 %v790
    %1061 = vmatprep.subr.mxu0 %v793
    %1062 = vmatpush1.msra.mxu0 %v792
    %1063 = vmatprep.subr.mxu0 %v795
    %1064 = vmatpush1.msra.mxu0 %v794
    %1065 = vmatprep.subr.mxu0 %v797
    %1066 = vmatpush1.msra.mxu0 %v796
    %1067 = vmatprep.subr.mxu0 %v799
    %1068 = vmatpush1.msra.mxu0 %v798
    %1069 = vmatprep.subr.mxu0 %v801
    %1070 = vmatpush1.msra.mxu0 %v800
    %1071 = vmatprep.subr.mxu0 %v803
    %1072 = vmatpush1.msra.mxu0 %v802
    %1073 = vmatprep.subr.mxu0 %v805
    %1074 = vmatpush1.msra.mxu0 %v804
    %1075 = vmatprep.subr.mxu0 %v807
    %1076 = vmatpush1.msra.mxu0 %v806
    %1077 = vmatprep.subr.mxu0 %v809
    %1078 = vmatpush1.msra.mxu0 %v808
    %1079 = vmatprep.subr.mxu0 %v811
    %1080 = vmatpush1.msra.mxu0 %v810
    %1081 = vmatprep.subr.mxu0 %v813
    %1082 = vmatpush1.msra.mxu0 %v812
    %1083 = vmatprep.subr.mxu0 %v815
    %1084 = vmatpush1.msra.mxu0 %v814
    %1085 = vmatprep.subr.mxu0 %v817
    %1086 = vmatpush1.msra.mxu0 %v816
    %1087 = vmatprep.subr.mxu0 %v819
    %1088 = vmatpush1.msra.mxu0 %v818
    %1089 = vmatprep.subr.mxu0 %v821
    %1090 = vmatpush1.msra.mxu0 %v820
    %1091 = vmatprep.subr.mxu0 %v823
    %1092 = vmatpush1.msra.mxu0 %v822
    %1093 = vmatprep.subr.mxu0 %v825
    %1094 = vmatpush1.msra.mxu0 %v824
    %1095 = vmatprep.subr.mxu0 %v827
    %1096 = vmatpush1.msra.mxu0 %v826
    %1097 = vmatprep.subr.mxu0 %v829
    %1098 = vmatpush1.msra.mxu0 %v828
    %1099 = vmatprep.subr.mxu0 %v831
    %1100 = vmatpush1.msra.mxu0 %v830
    %1101 = vmatprep.subr.mxu0 %v833
    %1102 = vmatpush1.msra.mxu0 %v832
    %1103 = vmatprep.subr.mxu0 %v835
    %1104 = vmatpush1.msra.mxu0 %v834
    %1105 = vmatprep.subr.mxu0 %v837
    %1106 = vmatpush1.msra.mxu0 %v836
    %1107 = vmatprep.subr.mxu0 %v839
    %1108 = vmatpush1.msra.mxu0 %v838
    %1109 = vmatprep.mubr.f32.mxu0 %v695
    %1110 = vmatmul.mubr.f32.gmra.mrb[0].mxu0 %v694
    %v1111 = vpop.f32.mrb[0].mxu0
    %v1112 = vadd.f32 %v1035, %v1111
    %v1113 = vpop.f32.mrb[0].mxu0
    %v1114 = vadd.f32 %v1037, %v1113
    %1115 = vmatprep.mubr.f32.mxu0 %v703
    %1116 = vmatmul.mubr.f32.gmra.mrb[0].mxu0 %v702
    %v1117 = vpop.f32.mrb[0].mxu0
    %v1118 = vadd.f32 %v1041, %v1117
    %v1119 = vpop.f32.mrb[0].mxu0
    %v1120 = vadd.f32 %v1043, %v1119
    %1121 = vdwg.mxu0
    %1122 = vmatprep.subr.mxu0 %v841
    %1123 = vmatpush1.msra.mxu0 %v840
    %1124 = vmatprep.subr.mxu0 %v843
    %1125 = vmatpush1.msra.mxu0 %v842
    %1126 = vmatprep.subr.mxu0 %v845
    %1127 = vmatpush1.msra.mxu0 %v844
    %1128 = vmatprep.subr.mxu0 %v847
    %1129 = vmatpush1.msra.mxu0 %v846
    %1130 = vmatprep.subr.mxu0 %v849
    %1131 = vmatpush1.msra.mxu0 %v848
    %1132 = vmatprep.subr.mxu0 %v851
    %1133 = vmatpush1.msra.mxu0 %v850
    %1134 = vmatprep.subr.mxu0 %v853
    %1135 = vmatpush1.msra.mxu0 %v852
    %1136 = vmatprep.subr.mxu0 %v855
    %1137 = vmatpush1.msra.mxu0 %v854
    %1138 = vmatprep.subr.mxu0 %v857
    %1139 = vmatpush1.msra.mxu0 %v856
    %1140 = vmatprep.subr.mxu0 %v859
    %1141 = vmatpush1.msra.mxu0 %v858
    %1142 = vmatprep.subr.mxu0 %v861
    %1143 = vmatpush1.msra.mxu0 %v860
    %1144 = vmatprep.subr.mxu0 %v863
    %1145 = vmatpush1.msra.mxu0 %v862
    %1146 = vmatprep.subr.mxu0 %v865
    %1147 = vmatpush1.msra.mxu0 %v864
    %1148 = vmatprep.subr.mxu0 %v867
    %1149 = vmatpush1.msra.mxu0 %v866
    %1150 = vmatprep.subr.mxu0 %v869
    %1151 = vmatpush1.msra.mxu0 %v868
    %1152 = vmatprep.subr.mxu0 %v871
    %1153 = vmatpush1.msra.mxu0 %v870
    %1154 = vmatprep.subr.mxu0 %v873
    %1155 = vmatpush1.msra.mxu0 %v872
    %1156 = vmatprep.subr.mxu0 %v875
    %1157 = vmatpush1.msra.mxu0 %v874
    %1158 = vmatprep.subr.mxu0 %v877
    %1159 = vmatpush1.msra.mxu0 %v876
    %1160 = vmatprep.subr.mxu0 %v879
    %1161 = vmatpush1.msra.mxu0 %v878
    %1162 = vmatprep.subr.mxu0 %v881
    %1163 = vmatpush1.msra.mxu0 %v880
    %1164 = vmatprep.subr.mxu0 %v883
    %1165 = vmatpush1.msra.mxu0 %v882
    %1166 = vmatprep.subr.mxu0 %v885
    %1167 = vmatpush1.msra.mxu0 %v884
    %1168 = vmatprep.subr.mxu0 %v887
    %1169 = vmatpush1.msra.mxu0 %v886
    %1170 = vmatprep.subr.mxu0 %v889
    %1171 = vmatpush1.msra.mxu0 %v888
    %1172 = vmatprep.subr.mxu0 %v891
    %1173 = vmatpush1.msra.mxu0 %v890
    %1174 = vmatprep.subr.mxu0 %v893
    %1175 = vmatpush1.msra.mxu0 %v892
    %1176 = vmatprep.subr.mxu0 %v895
    %1177 = vmatpush1.msra.mxu0 %v894
    %1178 = vmatprep.subr.mxu0 %v897
    %1179 = vmatpush1.msra.mxu0 %v896
    %1180 = vmatprep.subr.mxu0 %v899
    %1181 = vmatpush1.msra.mxu0 %v898
    %1182 = vmatprep.subr.mxu0 %v901
    %1183 = vmatpush1.msra.mxu0 %v900
    %1184 = vmatprep.subr.mxu0 %v903
    %1185 = vmatpush1.msra.mxu0 %v902
    %1186 = vmatprep.mubr.f32.mxu0 %v697
    %1187 = vmatmul.mubr.f32.gmra.mrb[0].mxu0 %v696
    %v1188 = vpop.f32.mrb[0].mxu0
    %v1189 = vadd.f32 %v1112, %v1188
    %v1190 = vpop.f32.mrb[0].mxu0
    %v1191 = vadd.f32 %v1114, %v1190
    %1192 = vmatprep.mubr.f32.mxu0 %v705
    %1193 = vmatmul.mubr.f32.gmra.mrb[0].mxu0 %v704
    %v1194 = vpop.f32.mrb[0].mxu0
    %v1195 = vadd.f32 %v1118, %v1194
    %v1196 = vpop.f32.mrb[0].mxu0
    %v1197 = vadd.f32 %v1120, %v1196
    %1198 = vdwg.mxu0
    %1199 = vmatprep.subr.mxu0 %v905
    %1200 = vmatpush1.msra.mxu0 %v904
    %1201 = vmatprep.subr.mxu0 %v907
    %1202 = vmatpush1.msra.mxu0 %v906
    %1203 = vmatprep.subr.mxu0 %v909
    %1204 = vmatpush1.msra.mxu0 %v908
    %1205 = vmatprep.subr.mxu0 %v911
    %1206 = vmatpush1.msra.mxu0 %v910
    %1207 = vmatprep.subr.mxu0 %v913
    %1208 = vmatpush1.msra.mxu0 %v912
    %1209 = vmatprep.subr.mxu0 %v915
    %1210 = vmatpush1.msra.mxu0 %v914
    %1211 = vmatprep.subr.mxu0 %v917
    %1212 = vmatpush1.msra.mxu0 %v916
    %1213 = vmatprep.subr.mxu0 %v919
    %1214 = vmatpush1.msra.mxu0 %v918
    %1215 = vmatprep.subr.mxu0 %v921
    %1216 = vmatpush1.msra.mxu0 %v920
    %1217 = vmatprep.subr.mxu0 %v923
    %1218 = vmatpush1.msra.mxu0 %v922
    %1219 = vmatprep.subr.mxu0 %v925
    %1220 = vmatpush1.msra.mxu0 %v924
    %1221 = vmatprep.subr.mxu0 %v927
    %1222 = vmatpush1.msra.mxu0 %v926
    %1223 = vmatprep.subr.mxu0 %v929
    %1224 = vmatpush1.msra.mxu0 %v928
    %1225 = vmatprep.subr.mxu0 %v931
    %1226 = vmatpush1.msra.mxu0 %v930
    %1227 = vmatprep.subr.mxu0 %v933
    %1228 = vmatpush1.msra.mxu0 %v932
    %1229 = vmatprep.subr.mxu0 %v935
    %1230 = vmatpush1.msra.mxu0 %v934
    %1231 = vmatprep.subr.mxu0 %v937
    %1232 = vmatpush1.msra.mxu0 %v936
    %1233 = vmatprep.subr.mxu0 %v939
    %1234 = vmatpush1.msra.mxu0 %v938
    %1235 = vmatprep.subr.mxu0 %v941
    %1236 = vmatpush1.msra.mxu0 %v940
    %1237 = vmatprep.subr.mxu0 %v943
    %1238 = vmatpush1.msra.mxu0 %v942
    %1239 = vmatprep.subr.mxu0 %v945
    %1240 = vmatpush1.msra.mxu0 %v944
    %1241 = vmatprep.subr.mxu0 %v947
    %1242 = vmatpush1.msra.mxu0 %v946
    %1243 = vmatprep.subr.mxu0 %v949
    %1244 = vmatpush1.msra.mxu0 %v948
    %1245 = vmatprep.subr.mxu0 %v951
    %1246 = vmatpush1.msra.mxu0 %v950
    %1247 = vmatprep.subr.mxu0 %v953
    %1248 = vmatpush1.msra.mxu0 %v952
    %1249 = vmatprep.subr.mxu0 %v955
    %1250 = vmatpush1.msra.mxu0 %v954
    %1251 = vmatprep.subr.mxu0 %v957
    %1252 = vmatpush1.msra.mxu0 %v956
    %1253 = vmatprep.subr.mxu0 %v959
    %1254 = vmatpush1.msra.mxu0 %v958
    %1255 = vmatprep.subr.mxu0 %v961
    %1256 = vmatpush1.msra.mxu0 %v960
    %1257 = vmatprep.subr.mxu0 %v963
    %1258 = vmatpush1.msra.mxu0 %v962
    %1259 = vmatprep.subr.mxu0 %v965
    %1260 = vmatpush1.msra.mxu0 %v964
    %1261 = vmatprep.subr.mxu0 %v967
    %1262 = vmatpush1.msra.mxu0 %v966
    %1263 = vmatprep.mubr.f32.mxu0 %v699
    %1264 = vmatmul.mubr.f32.gmra.mrb[0].mxu0 %v698
    %v1265 = vpop.f32.mrb[0].mxu0
    %v1266 = vadd.f32 %v1189, %v1265
    %v1267 = vpop.f32.mrb[0].mxu0
    %v1268 = vadd.f32 %v1191, %v1267
    %1269 = vmatprep.mubr.f32.mxu0 %v707
    %1270 = vmatmul.mubr.f32.gmra.mrb[0].mxu0 %v706
    %v1271 = vpop.f32.mrb[0].mxu0
    %v1272 = vadd.f32 %v1195, %v1271
    %v1273 = vpop.f32.mrb[0].mxu0
    %v1274 = vadd.f32 %v1197, %v1273
    %1275 = vdwg.mxu0
    %v1276 = vadd.f32 %v708, %v1266
    %v1277 = vadd.f32 %v709, %v1268
    %v1278 = vadd.f32 %v710, %v1272
    %v1279 = vadd.f32 %v711, %v1274
    %1280 = vst [vmem:[#allocation2] sm:$0xff] %v1276
    %1281 = vst [vmem:[#allocation2 + $0x8] sm:$0xff] %v1277
    %1282 = vst [vmem:[#allocation2 + $0x10] sm:$0xff] %v1278
    %1283 = vst [vmem:[#allocation2 + $0x18] sm:$0xff] %v1279
    // Predicated region
    $region42: #{tpu_custom_call.1} parent=1 // pred_check
      %p1284 = pneg %p74
    $region43: #{tpu_custom_call.1} parent=1 // pred_check_branch
      %1286 = sbr.rel (%p1284) target = $region45
    $region44: #{tpu_custom_call.1} parent=1 // pred_region
      %v1287 = vld [vmem:[#allocation2] sm:$0xff]
      %v1288 = vld [vmem:[#allocation2 + $0x8] sm:$0xff]
      %v1289 = vld [vmem:[#allocation2 + $0x10] sm:$0xff]
      %v1290 = vld [vmem:[#allocation2 + $0x18] sm:$0xff]
      %v1291 = vld [vmem:[%s4] sm:$0x3]
      %v1293 = vlaneseq
      %v1294 = vshrl.u32 %v1293, 7
      %v1295 = vsub.s32 0, %v1294
      %v1296 = vrot.slane %v1291, %v1295
      %v1297 = vlaneseq
      %v1298 = vshrl.u32 %v1297, 7
      %v1299 = vsub.s32 1, %v1298
      %v1300 = vrot.slane %v1291, %v1299
      %v1303 = vadd.f32 %v1287, %v1296
      %v1304 = vadd.f32 %v1288, %v1300
      %v1305 = vadd.f32 %v1289, %v1296
      %v1306 = vadd.f32 %v1290, %v1300
      %1307 = vst [vmem:[#allocation11] sm:$0xff] %v1303
      %1308 = vst [vmem:[#allocation11 + $0x8] sm:$0xff] %v1304
      %1309 = vst [vmem:[#allocation11 + $0x10] sm:$0xff] %v1305
      %1310 = vst [vmem:[#allocation11 + $0x18] sm:$0xff] %v1306
    $region45: #{tpu_custom_call.1} parent=1 // pred_fallthru
      _
    // Predicated region
    $region46: #{tpu_custom_call.1} parent=1 // pred_check
      _
    $region47: #{tpu_custom_call.1} parent=1 // pred_check_branch
      %1312 = sbr.rel (0) target = $region49
    $region48: #{tpu_custom_call.1} parent=1 // pred_region
      %s1314 = ssub.s32 512, 512
      %1315 = vsyncadd [#allocation5], %s1314
      %s1316 = sshll.u32 [#allocation11], 4
      %s1317 = int_to_ptr.vmem [resolvable:$true] %s1316
      %1322 = dma.vmem_to_hbm [thread:$0]  %s1317, 512, %s5, [#allocation5], 256, 256, 16
    $region49: #{tpu_custom_call.1} parent=1 // pred_fallthru
      _
    // Predicated region
    $region50: #{tpu_custom_call.1} parent=1 // pred_check
      _
    $region51: #{tpu_custom_call.1} parent=1 // pred_check_branch
      %1324 = sbr.rel (0) target = $region53
    $region52: #{tpu_custom_call.1} parent=1 // pred_region
      %1325 = dma.done [#allocation5], 512
    $region53: #{tpu_custom_call.1} parent=1 // pred_fallthru
      _
    %1326 = vsyncpa [#allocation4], 1
    %1327 = vsyncpa [#allocation7], 1
    %1328 = vsyncpa [#allocation10], 1
    %1329 = vsyncpa [#allocation5], 1

</llo_original>
